<compile_context>
chip_gen: v6e
topology: v6e:2x2x1
jax: 0.10.0
libtpu: 0.0.40
codegen_flags: <defaults>
</compile_context>

<pallas_src>
import functools

import jax
import jax.numpy as jnp
from jax.experimental import pallas as pl
from jax.experimental.pallas import tpu as pltpu


def _round_up(x, m):
    return (x + m - 1) // m * m


def _pad2(x, rows, cols, dtype):
    """Cast to the target (narrow) dtype first, then zero-pad (no f32 Np^2 buffer)."""
    if x.dtype != dtype:
        x = x.astype(dtype)
    pr, pc = rows - x.shape[0], cols - x.shape[1]
    if pr or pc:
        x = jnp.pad(x, ((0, pr), (0, pc)))
    return x


# ---------------------------------------------------------------------------
# Kernel 1: feature projection  xw1 = x @ W1   (cheap, row-tiled)
# ---------------------------------------------------------------------------
def proj_kernel(x_ref, w_ref, o_ref):
    o_ref[...] = jnp.dot(
        x_ref[...], w_ref[...], preferred_element_type=jnp.float32
    ).astype(o_ref.dtype)


# ---------------------------------------------------------------------------
# Kernel 2: hw2 = leaky_relu(A @ xw1 + b1) @ W2
#   f32 accumulator over the A-contraction axis; bias + activation + W2
#   projection only in the final-k epilogue.  `resident=True` means xw1_ref
#   is the whole (Np, hid_p) slab kept in VMEM and we slice the k-th panel.
# ---------------------------------------------------------------------------
def layer1_kernel(a_ref, xw1_ref, b1_ref, w2_ref, o_ref, acc_ref, *, tk, resident):
    k = pl.program_id(1)

    @pl.when(k == 0)
    def _():
        acc_ref[...] = jnp.zeros_like(acc_ref)

    if resident:
        start = pl.multiple_of(k * tk, 128)
        feat = xw1_ref[pl.ds(start, tk), :]
    else:
        feat = xw1_ref[...]
    acc_ref[...] += jnp.dot(a_ref[...], feat, preferred_element_type=jnp.float32)

    @pl.when(k == pl.num_programs(1) - 1)
    def _():
        h = acc_ref[...] + b1_ref[...]
        h = jnp.maximum(h, 0.01 * h)  # F.leaky_relu default slope = 0.01
        o_ref[...] = jnp.dot(
            h.astype(jnp.bfloat16), w2_ref[...], preferred_element_type=jnp.float32
        ).astype(o_ref.dtype)


# ---------------------------------------------------------------------------
# Kernel 3: out = A @ hw2 + b2
# ---------------------------------------------------------------------------
def layer2_kernel(a_ref, hw2_ref, b2_ref, o_ref, acc_ref, *, tk, resident):
    k = pl.program_id(1)

    @pl.when(k == 0)
    def _():
        acc_ref[...] = jnp.zeros_like(acc_ref)

    if resident:
        start = pl.multiple_of(k * tk, 128)
        feat = hw2_ref[pl.ds(start, tk), :]
    else:
        feat = hw2_ref[...]
    acc_ref[...] += jnp.dot(a_ref[...], feat, preferred_element_type=jnp.float32)

    @pl.when(k == pl.num_programs(1) - 1)
    def _():
        o_ref[...] = (acc_ref[...] + b2_ref[...]).astype(o_ref.dtype)


@jax.jit
def gcn_forward(A, feats, w1_t, b1, w2_t, b2):
    N, in_feats = feats.shape
    hid_feats = w1_t.shape[1]
    out_feats = w2_t.shape[1]

    LANE = 128
    MiB = 1 << 20
    f32, bf16 = jnp.float32, jnp.bfloat16

    in_p = _round_up(in_feats, LANE)
    hid_p = _round_up(hid_feats, LANE)
    out_p = _round_up(out_feats, LANE)

    # --- pick tiles first, then pad the node axis to the tile (zero-padded
    #     A rows/cols are mathematically inert) -------------------------------
    Np0 = _round_up(N, LANE)
    if Np0 >= 1024:
        tm, tk = 512, 1024                       # 1 MiB bf16 A slab per buffer
    else:
        tk = Np0
        tm = Np0 // 2 if Np0 >= 256 else Np0     # >=2 row tiles for v7x megacore
    Np = _round_up(N, tk)                        # tm divides tk in both branches

    # --- VMEM residency decision for the narrow feature slabs ----------------
    RES_CAP = 24 * MiB                           # double-buffered resident slab cap
    res1 = 2 * Np * hid_p * 2 <= RES_CAP         # xw1 resident in kernel 2?
    res2 = 2 * Np * out_p * 2 <= RES_CAP         # hw2 resident in kernel 3?

    def agg_vmem(feat_w, proj_w, res, out_elem_bytes, has_w2):
        b = 2 * tm * tk * 2                                 # A tiles (x2 buffers)
        b += (2 * Np if res else 2 * tk) * feat_w * 2       # feature slab
        b += tm * feat_w * 4                                # f32 accumulator
        b += 2 * tm * proj_w * out_elem_bytes               # output (x2 buffers)
        b += 2 * proj_w * 4                                 # bias
        if has_w2:
            b += 2 * feat_w * proj_w * 2                    # W2
        return b

    proj_vmem = 2 * tm * in_p * 2 + 2 * in_p * hid_p * 2 + 2 * tm * hid_p * 2
    need = max(
        agg_vmem(hid_p, out_p, res1, 2, True),
        agg_vmem(out_p, out_p, res2, 4, False),
        proj_vmem,
    )
    # >= 32 MiB unlocks v5e's 16 MiB scoped default; <= 56 MiB keeps v7x (64 MiB) safe.
    vmem_limit = int(min(56 * MiB, max(32 * MiB, need + 8 * MiB)))

    # --- zero-pad to lane-aligned shapes (bf16 MXU operands, f32 biases) -----
    A_p = _pad2(A, Np, Np, bf16)
    x_p = _pad2(feats, Np, in_p, bf16)
    w1_p = _pad2(w1_t, in_p, hid_p, bf16)
    w2_p = _pad2(w2_t, hid_p, out_p, bf16)
    b1_p = _pad2(b1.reshape(1, -1), 1, hid_p, f32)
    b2_p = _pad2(b2.reshape(1, -1), 1, out_p, f32)

    # --- kernel 1: xw1 = x @ W1 ----------------------------------------------
    xw1 = pl.pallas_call(
        proj_kernel,
        out_shape=jax.ShapeDtypeStruct((Np, hid_p), bf16),
        grid=(Np // tm,),
        in_specs=[
            pl.BlockSpec((tm, in_p), lambda i: (i, 0)),
            pl.BlockSpec((in_p, hid_p), lambda i: (0, 0)),
        ],
        out_specs=pl.BlockSpec((tm, hid_p), lambda i: (i, 0)),
        compiler_params=pltpu.CompilerParams(
            dimension_semantics=("parallel",), vmem_limit_bytes=vmem_limit
        ),
    )(x_p, w1_p)

    grid = (Np // tm, Np // tk)
    agg_params = pltpu.CompilerParams(
        dimension_semantics=("parallel", "arbitrary"), vmem_limit_bytes=vmem_limit
    )

    # --- kernel 2: hw2 = leaky_relu(A @ xw1 + b1) @ W2 -----------------------
    xw1_spec = (
        pl.BlockSpec((Np, hid_p), lambda i, k: (0, 0))      # VMEM-resident slab
        if res1
        else pl.BlockSpec((tk, hid_p), lambda i, k: (k, 0)) # streamed fallback
    )
    hw2 = pl.pallas_call(
        functools.partial(layer1_kernel, tk=tk, resident=res1),
        out_shape=jax.ShapeDtypeStruct((Np, out_p), bf16),
        grid=grid,
        in_specs=[
            pl.BlockSpec((tm, tk), lambda i, k: (i, k)),
            xw1_spec,
            pl.BlockSpec((1, hid_p), lambda i, k: (0, 0)),
            pl.BlockSpec((hid_p, out_p), lambda i, k: (0, 0)),
        ],
        out_specs=pl.BlockSpec((tm, out_p), lambda i, k: (i, 0)),
        scratch_shapes=[pltpu.VMEM((tm, hid_p), jnp.float32)],
        compiler_params=agg_params,
    )(A_p, xw1, b1_p, w2_p)

    # --- kernel 3: out = A @ hw2 + b2 ----------------------------------------
    hw2_spec = (
        pl.BlockSpec((Np, out_p), lambda i, k: (0, 0))
        if res2
        else pl.BlockSpec((tk, out_p), lambda i, k: (k, 0))
    )
    out_full = pl.pallas_call(
        functools.partial(layer2_kernel, tk=tk, resident=res2),
        out_shape=jax.ShapeDtypeStruct((Np, out_p), f32),
        grid=grid,
        in_specs=[
            pl.BlockSpec((tm, tk), lambda i, k: (i, k)),
            hw2_spec,
            pl.BlockSpec((1, out_p), lambda i, k: (0, 0)),
        ],
        out_specs=pl.BlockSpec((tm, out_p), lambda i, k: (i, 0)),
        scratch_shapes=[pltpu.VMEM((tm, out_p), jnp.float32)],
        compiler_params=agg_params,
    )(A_p, hw2, b2_p)

    # TODO(synk): for graphs small enough that bf16 A fits VMEM, a single fused
    # kernel could stream A from HBM once instead of twice (~1.7x on the total).
    return out_full[:N, :out_feats]


def gcn_ref(A, feats, w1_t, b1, w2_t, b2):
    h = (A @ feats) @ w1_t + b1
    h = jnp.where(h > 0, h, 0.01 * h)
    return (A @ h) @ w2_t + b2


if __name__ == "__main__":
    # Small shapes consistent with the module: N nodes, in/hid/out feature dims.
    N, in_feats, hid_feats, out_feats = 16, 8, 32, 8

    key = jax.random.PRNGKey(0)
    k_a, k_x, k_w1, k_b1, k_w2, k_b2 = jax.random.split(key, 6)

    # Adjacency-like matrix A (dense, row-normalized for GCN flavor).
    A_raw = jax.random.uniform(k_a, (N, N), dtype=jnp.float32)
    A = A_raw / jnp.sum(A_raw, axis=1, keepdims=True)

    feats = jax.random.normal(k_x, (N, in_feats), dtype=jnp.float32)

    # Deterministic "Linear" parameters; stored pre-transposed as [in, out].
    w1_t = jax.random.normal(k_w1, (in_feats, hid_feats), dtype=jnp.float32) * 0.1
    b1 = jax.random.normal(k_b1, (1, hid_feats), dtype=jnp.float32) * 0.1
    w2_t = jax.random.normal(k_w2, (hid_feats, out_feats), dtype=jnp.float32) * 0.1
    b2 = jax.random.normal(k_b2, (1, out_feats), dtype=jnp.float32) * 0.1

    out = gcn_forward(A, feats, w1_t, b1, w2_t, b2)
    out = jax.block_until_ready(out)

    ref = gcn_ref(A, feats, w1_t, b1, w2_t, b2)
    assert out.shape == (N, out_feats)
    # bf16 MXU operands with f32 accumulation -> relaxed tolerance vs f32 ref.
    assert jnp.allclose(out, ref, atol=1e-2, rtol=1e-2), "mismatch vs reference"

    print("KERNEL_OK")
</pallas_src>

<mosaic_0001>
module attributes {stable_mosaic.version = 11 : i64} {
  func.func @proj_kernel(%arg0: i32, %arg1: memref<128x128xbf16, #tpu.memory_space<vmem>>, %arg2: memref<128x128xbf16, #tpu.memory_space<vmem>>, %arg3: memref<128x128xbf16, #tpu.memory_space<vmem>>) attributes {dimension_semantics = [#tpu.dimension_semantics<parallel>], iteration_bounds = array<i64: 1>, scalar_prefetch = 0 : i64, scratch_operands = 0 : i64, tpu.core_type = #tpu.core_type<tc>, window_params = [{transform_indices = @transform_0, window_bounds = array<i64: 128, 128>}, {pipeline_mode = #tpu.pipeline_mode<synchronous>, transform_indices = @transform_1, window_bounds = array<i64: 128, 128>}, {transform_indices = @transform_2, window_bounds = array<i64: 128, 128>}]} {
    %c0 = arith.constant 0 : index
    %c0_0 = arith.constant 0 : index
    %0 = vector.load %arg1[%c0, %c0_0] : memref<128x128xbf16, #tpu.memory_space<vmem>>, vector<128x128xbf16>
    %c0_1 = arith.constant 0 : index
    %c0_2 = arith.constant 0 : index
    %1 = vector.load %arg2[%c0_1, %c0_2] : memref<128x128xbf16, #tpu.memory_space<vmem>>, vector<128x128xbf16>
    %cst = arith.constant dense<0.000000e+00> : vector<128x128xf32>
    %2 = tpu.matmul %0, %1, %cst {dimension_numbers = #tpu.dot_dimension_numbers<[1], [0], [0], [1], [0, 0, 1, 1], [], []>} : vector<128x128xbf16>, vector<128x128xbf16>, vector<128x128xf32> -> vector<128x128xf32>
    %3 = arith.truncf %2 : vector<128x128xf32> to vector<128x128xbf16>
    %c0_3 = arith.constant 0 : index
    %c0_4 = arith.constant 0 : index
    %4 = vector.load %arg3[%c0_3, %c0_4] : memref<128x128xbf16, #tpu.memory_space<vmem>>, vector<128x128xbf16>
    tpu.vector_store %arg3[%c0_3, %c0_4], %3 {strides = array<i32>} : memref<128x128xbf16, #tpu.memory_space<vmem>>, vector<128x128xbf16>,
    return
  }
  func.func @transform_0(%arg0: i32) -> (i32, i32) {
    %c0_i32 = arith.constant 0 : i32
    %c0_i32_0 = arith.constant 0 : i32
    return %arg0, %c0_i32 : i32, i32
  }
  func.func @transform_1(%arg0: i32) -> (i32, i32) {
    %c0_i32 = arith.constant 0 : i32
    %c0_i32_0 = arith.constant 0 : i32
    %c0_i32_1 = arith.constant 0 : i32
    return %c0_i32, %c0_i32_0 : i32, i32
  }
  func.func @transform_2(%arg0: i32) -> (i32, i32) {
    %c0_i32 = arith.constant 0 : i32
    %c0_i32_0 = arith.constant 0 : i32
    return %arg0, %c0_i32 : i32, i32
  }
}

module attributes {stable_mosaic.version = 11 : i64} {
  func.func @layer1_kernel(%arg0: i32, %arg1: i32, %arg2: memref<128x128xbf16, #tpu.memory_space<vmem>>, %arg3: memref<128x128xbf16, #tpu.memory_space<vmem>>, %arg4: memref<1x128xf32, #tpu.memory_space<vmem>>, %arg5: memref<128x128xbf16, #tpu.memory_space<vmem>>, %arg6: memref<128x128xbf16, #tpu.memory_space<vmem>>, %arg7: memref<128x128xf32, #tpu.memory_space<vmem>>) attributes {dimension_semantics = [#tpu.dimension_semantics<parallel>, #tpu.dimension_semantics<arbitrary>], iteration_bounds = array<i64: 1, 1>, scalar_prefetch = 0 : i64, scratch_operands = 1 : i64, tpu.core_type = #tpu.core_type<tc>, window_params = [{transform_indices = @transform_0, window_bounds = array<i64: 128, 128>}, {pipeline_mode = #tpu.pipeline_mode<synchronous>, transform_indices = @transform_1, window_bounds = array<i64: 128, 128>}, {pipeline_mode = #tpu.pipeline_mode<synchronous>, transform_indices = @transform_2, window_bounds = array<i64: 1, 128>}, {pipeline_mode = #tpu.pipeline_mode<synchronous>, transform_indices = @transform_3, window_bounds = array<i64: 128, 128>}, {transform_indices = @transform_4, window_bounds = array<i64: 128, 128>}]} {
    %c0_i32 = arith.constant 0 : i32
    %0 = arith.cmpi eq, %arg1, %c0_i32 : i32
    %1 = arith.extui %0 : i1 to i32
    %c0_i32_0 = arith.constant 0 : i32
    %2 = arith.cmpi ne, %1, %c0_i32_0 : i32
    scf.if %2 {
      %cst_9 = arith.constant 0.000000e+00 : f32
      %15 = vector.broadcast %cst_9 : f32 to vector<128x128xf32>
      %c0_10 = arith.constant 0 : index
      %c0_11 = arith.constant 0 : index
      %16 = vector.load %arg7[%c0_10, %c0_11] : memref<128x128xf32, #tpu.memory_space<vmem>>, vector<128x128xf32>
      tpu.vector_store %arg7[%c0_10, %c0_11], %15 {strides = array<i32>} : memref<128x128xf32, #tpu.memory_space<vmem>>, vector<128x128xf32>,
    } else {
    }
    %c128_i32 = arith.constant 128 : i32
    %3 = arith.muli %arg1, %c128_i32 : i32
    %4 = tpu.assume_multiple %3, 128 : i32
    %5 = arith.index_cast %4 : i32 to index
    %c0 = arith.constant 0 : index
    %6 = vector.load %arg3[%5, %c0] : memref<128x128xbf16, #tpu.memory_space<vmem>>, vector<128x128xbf16>
    %c0_1 = arith.constant 0 : index
    %c0_2 = arith.constant 0 : index
    %7 = vector.load %arg7[%c0_1, %c0_2] : memref<128x128xf32, #tpu.memory_space<vmem>>, vector<128x128xf32>
    %c0_3 = arith.constant 0 : index
    %c0_4 = arith.constant 0 : index
    %8 = vector.load %arg2[%c0_3, %c0_4] : memref<128x128xbf16, #tpu.memory_space<vmem>>, vector<128x128xbf16>
    %cst = arith.constant dense<0.000000e+00> : vector<128x128xf32>
    %9 = tpu.matmul %8, %6, %cst {dimension_numbers = #tpu.dot_dimension_numbers<[1], [0], [0], [1], [0, 0, 1, 1], [], []>} : vector<128x128xbf16>, vector<128x128xbf16>, vector<128x128xf32> -> vector<128x128xf32>
    %10 = arith.addf %7, %9 : vector<128x128xf32>
    %c0_5 = arith.constant 0 : index
    %c0_6 = arith.constant 0 : index
    %11 = vector.load %arg7[%c0_5, %c0_6] : memref<128x128xf32, #tpu.memory_space<vmem>>, vector<128x128xf32>
    tpu.vector_store %arg7[%c0_5, %c0_6], %10 {strides = array<i32>} : memref<128x128xf32, #tpu.memory_space<vmem>>, vector<128x128xf32>,
    %c0_i32_7 = arith.constant 0 : i32
    %12 = arith.cmpi eq, %arg1, %c0_i32_7 : i32
    %13 = arith.extui %12 : i1 to i32
    %c0_i32_8 = arith.constant 0 : i32
    %14 = arith.cmpi ne, %13, %c0_i32_8 : i32
    scf.if %14 {
      %c0_9 = arith.constant 0 : index
      %c0_10 = arith.constant 0 : index
      %15 = vector.load %arg7[%c0_9, %c0_10] : memref<128x128xf32, #tpu.memory_space<vmem>>, vector<128x128xf32>
      %c0_11 = arith.constant 0 : index
      %c0_12 = arith.constant 0 : index
      %16 = vector.load %arg4[%c0_11, %c0_12] : memref<1x128xf32, #tpu.memory_space<vmem>>, vector<1x128xf32>
      %17 = vector.broadcast %16 : vector<1x128xf32> to vector<128x128xf32>
      %18 = arith.addf %15, %17 : vector<128x128xf32>
      %cst_13 = arith.constant 0.00999999977 : f32
      %19 = vector.broadcast %cst_13 : f32 to vector<128x128xf32>
      %20 = arith.mulf %19, %18 : vector<128x128xf32>
      %21 = arith.maximumf %18, %20 : vector<128x128xf32>
      %22 = arith.truncf %21 : vector<128x128xf32> to vector<128x128xbf16>
      %c0_14 = arith.constant 0 : index
      %c0_15 = arith.constant 0 : index
      %23 = vector.load %arg5[%c0_14, %c0_15] : memref<128x128xbf16, #tpu.memory_space<vmem>>, vector<128x128xbf16>
      %cst_16 = arith.constant dense<0.000000e+00> : vector<128x128xf32>
      %24 = tpu.matmul %22, %23, %cst_16 {dimension_numbers = #tpu.dot_dimension_numbers<[1], [0], [0], [1], [0, 0, 1, 1], [], []>} : vector<128x128xbf16>, vector<128x128xbf16>, vector<128x128xf32> -> vector<128x128xf32>
      %25 = arith.truncf %24 : vector<128x128xf32> to vector<128x128xbf16>
      %c0_17 = arith.constant 0 : index
      %c0_18 = arith.constant 0 : index
      %26 = vector.load %arg6[%c0_17, %c0_18] : memref<128x128xbf16, #tpu.memory_space<vmem>>, vector<128x128xbf16>
      tpu.vector_store %arg6[%c0_17, %c0_18], %25 {strides = array<i32>} : memref<128x128xbf16, #tpu.memory_space<vmem>>, vector<128x128xbf16>,
    } else {
    }
    return
  }
  func.func @transform_0(%arg0: i32, %arg1: i32) -> (i32, i32) {
    %c0_i32 = arith.constant 0 : i32
    return %arg0, %arg1 : i32, i32
  }
  func.func @transform_1(%arg0: i32, %arg1: i32) -> (i32, i32) {
    %c0_i32 = arith.constant 0 : i32
    %c0_i32_0 = arith.constant 0 : i32
    %c0_i32_1 = arith.constant 0 : i32
    return %c0_i32, %c0_i32_0 : i32, i32
  }
  func.func @transform_2(%arg0: i32, %arg1: i32) -> (i32, i32) {
    %c0_i32 = arith.constant 0 : i32
    %c0_i32_0 = arith.constant 0 : i32
    %c0_i32_1 = arith.constant 0 : i32
    return %c0_i32, %c0_i32_0 : i32, i32
  }
  func.func @transform_3(%arg0: i32, %arg1: i32) -> (i32, i32) {
    %c0_i32 = arith.constant 0 : i32
    %c0_i32_0 = arith.constant 0 : i32
    %c0_i32_1 = arith.constant 0 : i32
    return %c0_i32, %c0_i32_0 : i32, i32
  }
  func.func @transform_4(%arg0: i32, %arg1: i32) -> (i32, i32) {
    %c0_i32 = arith.constant 0 : i32
    %c0_i32_0 = arith.constant 0 : i32
    return %arg0, %c0_i32 : i32, i32
  }
}

module attributes {stable_mosaic.version = 11 : i64} {
  func.func @layer2_kernel(%arg0: i32, %arg1: i32, %arg2: memref<128x128xbf16, #tpu.memory_space<vmem>>, %arg3: memref<128x128xbf16, #tpu.memory_space<vmem>>, %arg4: memref<1x128xf32, #tpu.memory_space<vmem>>, %arg5: memref<128x128xf32, #tpu.memory_space<vmem>>, %arg6: memref<128x128xf32, #tpu.memory_space<vmem>>) attributes {dimension_semantics = [#tpu.dimension_semantics<parallel>, #tpu.dimension_semantics<arbitrary>], iteration_bounds = array<i64: 1, 1>, scalar_prefetch = 0 : i64, scratch_operands = 1 : i64, tpu.core_type = #tpu.core_type<tc>, window_params = [{transform_indices = @transform_0, window_bounds = array<i64: 128, 128>}, {pipeline_mode = #tpu.pipeline_mode<synchronous>, transform_indices = @transform_1, window_bounds = array<i64: 128, 128>}, {pipeline_mode = #tpu.pipeline_mode<synchronous>, transform_indices = @transform_2, window_bounds = array<i64: 1, 128>}, {transform_indices = @transform_3, window_bounds = array<i64: 128, 128>}]} {
    %c0_i32 = arith.constant 0 : i32
    %0 = arith.cmpi eq, %arg1, %c0_i32 : i32
    %1 = arith.extui %0 : i1 to i32
    %c0_i32_0 = arith.constant 0 : i32
    %2 = arith.cmpi ne, %1, %c0_i32_0 : i32
    scf.if %2 {
      %cst_9 = arith.constant 0.000000e+00 : f32
      %15 = vector.broadcast %cst_9 : f32 to vector<128x128xf32>
      %c0_10 = arith.constant 0 : index
      %c0_11 = arith.constant 0 : index
      %16 = vector.load %arg6[%c0_10, %c0_11] : memref<128x128xf32, #tpu.memory_space<vmem>>, vector<128x128xf32>
      tpu.vector_store %arg6[%c0_10, %c0_11], %15 {strides = array<i32>} : memref<128x128xf32, #tpu.memory_space<vmem>>, vector<128x128xf32>,
    } else {
    }
    %c128_i32 = arith.constant 128 : i32
    %3 = arith.muli %arg1, %c128_i32 : i32
    %4 = tpu.assume_multiple %3, 128 : i32
    %5 = arith.index_cast %4 : i32 to index
    %c0 = arith.constant 0 : index
    %6 = vector.load %arg3[%5, %c0] : memref<128x128xbf16, #tpu.memory_space<vmem>>, vector<128x128xbf16>
    %c0_1 = arith.constant 0 : index
    %c0_2 = arith.constant 0 : index
    %7 = vector.load %arg6[%c0_1, %c0_2] : memref<128x128xf32, #tpu.memory_space<vmem>>, vector<128x128xf32>
    %c0_3 = arith.constant 0 : index
    %c0_4 = arith.constant 0 : index
    %8 = vector.load %arg2[%c0_3, %c0_4] : memref<128x128xbf16, #tpu.memory_space<vmem>>, vector<128x128xbf16>
    %cst = arith.constant dense<0.000000e+00> : vector<128x128xf32>
    %9 = tpu.matmul %8, %6, %cst {dimension_numbers = #tpu.dot_dimension_numbers<[1], [0], [0], [1], [0, 0, 1, 1], [], []>} : vector<128x128xbf16>, vector<128x128xbf16>, vector<128x128xf32> -> vector<128x128xf32>
    %10 = arith.addf %7, %9 : vector<128x128xf32>
    %c0_5 = arith.constant 0 : index
    %c0_6 = arith.constant 0 : index
    %11 = vector.load %arg6[%c0_5, %c0_6] : memref<128x128xf32, #tpu.memory_space<vmem>>, vector<128x128xf32>
    tpu.vector_store %arg6[%c0_5, %c0_6], %10 {strides = array<i32>} : memref<128x128xf32, #tpu.memory_space<vmem>>, vector<128x128xf32>,
    %c0_i32_7 = arith.constant 0 : i32
    %12 = arith.cmpi eq, %arg1, %c0_i32_7 : i32
    %13 = arith.extui %12 : i1 to i32
    %c0_i32_8 = arith.constant 0 : i32
    %14 = arith.cmpi ne, %13, %c0_i32_8 : i32
    scf.if %14 {
      %c0_9 = arith.constant 0 : index
      %c0_10 = arith.constant 0 : index
      %15 = vector.load %arg6[%c0_9, %c0_10] : memref<128x128xf32, #tpu.memory_space<vmem>>, vector<128x128xf32>
      %c0_11 = arith.constant 0 : index
      %c0_12 = arith.constant 0 : index
      %16 = vector.load %arg4[%c0_11, %c0_12] : memref<1x128xf32, #tpu.memory_space<vmem>>, vector<1x128xf32>
      %17 = vector.broadcast %16 : vector<1x128xf32> to vector<128x128xf32>
      %18 = arith.addf %15, %17 : vector<128x128xf32>
      %c0_13 = arith.constant 0 : index
      %c0_14 = arith.constant 0 : index
      %19 = vector.load %arg5[%c0_13, %c0_14] : memref<128x128xf32, #tpu.memory_space<vmem>>, vector<128x128xf32>
      tpu.vector_store %arg5[%c0_13, %c0_14], %18 {strides = array<i32>} : memref<128x128xf32, #tpu.memory_space<vmem>>, vector<128x128xf32>,
    } else {
    }
    return
  }
  func.func @transform_0(%arg0: i32, %arg1: i32) -> (i32, i32) {
    %c0_i32 = arith.constant 0 : i32
    return %arg0, %arg1 : i32, i32
  }
  func.func @transform_1(%arg0: i32, %arg1: i32) -> (i32, i32) {
    %c0_i32 = arith.constant 0 : i32
    %c0_i32_0 = arith.constant 0 : i32
    %c0_i32_1 = arith.constant 0 : i32
    return %c0_i32, %c0_i32_0 : i32, i32
  }
  func.func @transform_2(%arg0: i32, %arg1: i32) -> (i32, i32) {
    %c0_i32 = arith.constant 0 : i32
    %c0_i32_0 = arith.constant 0 : i32
    %c0_i32_1 = arith.constant 0 : i32
    return %c0_i32, %c0_i32_0 : i32, i32
  }
  func.func @transform_3(%arg0: i32, %arg1: i32) -> (i32, i32) {
    %c0_i32 = arith.constant 0 : i32
    %c0_i32_0 = arith.constant 0 : i32
    return %arg0, %c0_i32 : i32, i32
  }
}

</mosaic_0001>

<llo_original>
// kernel: gcn_forward.5
$region0: #{gcn_forward.5}
  #allocation0 [shape = 'u32[]', space=smem, size = 0x4, offset = 0x4, fixed_abs, tag = 'smem constant byte address 0x4 - core index']
  #allocation1 [shape = 'u32[144,128]{1,0:T(1,128)}', space=vmem, size = 0x12000, scoped, tag = 'internal scratch']
  #allocation2 [shape = 'f32[128,128]{1,0:T(8,128)}', space=vmem, size = 0x10000, scoped, tag = 'scratch operand']
  %s0 = inlined_call_operand.vmem [shape: bf16[128,128], index: 0, kind: input, shape index: {}]
  %s1 = inlined_call_operand.vmem [shape: bf16[128,128], index: 1, kind: input, shape index: {}]
  %s2 = inlined_call_operand.vmem [shape: f32[1,128], index: 2, kind: input, shape index: {}]
  %s3 = inlined_call_operand.vmem [shape: f32[128,128], index: 3, kind: output, shape index: {}]
  %s4 = sld [smem:[#allocation0]]
  $region30: #{gcn_forward.5} parent=0
    _
  %s6 = ssub.s32 1, %s4
  %s7 = scalar_select 0, %s6, %s4
  // Predicated region
  $region2: #{gcn_forward.5} parent=0 // pred_check
    _
  $region3: #{gcn_forward.5} parent=0 // pred_check_branch
    %9 = sbr.rel (0) target = $region5
  $region4: #{gcn_forward.5} parent=0 // pred_region
    _
  $region5: #{gcn_forward.5} parent=0 // pred_fallthru
    _
  // Predicated region
  $region6: #{gcn_forward.5} parent=0 // pred_check
    _
  $region7: #{gcn_forward.5} parent=0 // pred_check_branch
    %11 = sbr.rel (0) target = $region9
  $region8: #{gcn_forward.5} parent=0 // pred_region
    _
  $region9: #{gcn_forward.5} parent=0 // pred_fallthru
    _
  // Predicated region
  $region10: #{gcn_forward.5} parent=0 // pred_check
    _
  $region11: #{gcn_forward.5} parent=0 // pred_check_branch
    %13 = sbr.rel (0) target = $region13
  $region12: #{gcn_forward.5} parent=0 // pred_region
    _
  $region13: #{gcn_forward.5} parent=0 // pred_fallthru
    _
  %p15 = scmp.eq.s32.totalorder 0, 0
  // Predicated region
  $region14: #{gcn_forward.5} parent=0 // pred_check
    %p16 = pneg %p15
  $region15: #{gcn_forward.5} parent=0 // pred_check_branch
    %18 = sbr.rel (%p16) target = $region17
  $region16: #{gcn_forward.5} parent=0 // pred_region
    %19 = vst [vmem:[#allocation2] sm:$0xff] 0.0
    %20 = vst [vmem:[#allocation2 + $0x8] sm:$0xff] 0.0
    %21 = vst [vmem:[#allocation2 + $0x10] sm:$0xff] 0.0
    %22 = vst [vmem:[#allocation2 + $0x18] sm:$0xff] 0.0
    %23 = vst [vmem:[#allocation2 + $0x20] sm:$0xff] 0.0
    %24 = vst [vmem:[#allocation2 + $0x28] sm:$0xff] 0.0
    %25 = vst [vmem:[#allocation2 + $0x30] sm:$0xff] 0.0
    %26 = vst [vmem:[#allocation2 + $0x38] sm:$0xff] 0.0
    %27 = vst [vmem:[#allocation2 + $0x40] sm:$0xff] 0.0
    %28 = vst [vmem:[#allocation2 + $0x48] sm:$0xff] 0.0
    %29 = vst [vmem:[#allocation2 + $0x50] sm:$0xff] 0.0
    %30 = vst [vmem:[#allocation2 + $0x58] sm:$0xff] 0.0
    %31 = vst [vmem:[#allocation2 + $0x60] sm:$0xff] 0.0
    %32 = vst [vmem:[#allocation2 + $0x68] sm:$0xff] 0.0
    %33 = vst [vmem:[#allocation2 + $0x70] sm:$0xff] 0.0
    %34 = vst [vmem:[#allocation2 + $0x78] sm:$0xff] 0.0
  $region17: #{gcn_forward.5} parent=0 // pred_fallthru
    _
  %s35 = smul.u32 0, 128
  %s36 = sshra.s32 %s35, 3
  %s37 = sand.u32 %s35, 7
  %s38 = smul.addr %s36, 4
  %s39 = scalar_lea.vmem %s1, %s38
  %v40 = vld [vmem:[%s39] sm:$0xf]
  %v41 = vld [vmem:[%s39 + $0x4] sm:$0xf]
  %v42 = vld [vmem:[%s39 + $0x8] sm:$0xf]
  %v43 = vld [vmem:[%s39 + $0xc] sm:$0xf]
  %v44 = vld [vmem:[%s39 + $0x10] sm:$0xf]
  %v45 = vld [vmem:[%s39 + $0x14] sm:$0xf]
  %v46 = vld [vmem:[%s39 + $0x18] sm:$0xf]
  %v47 = vld [vmem:[%s39 + $0x1c] sm:$0xf]
  %v48 = vld [vmem:[%s39 + $0x20] sm:$0xf]
  %v49 = vld [vmem:[%s39 + $0x24] sm:$0xf]
  %v50 = vld [vmem:[%s39 + $0x28] sm:$0xf]
  %v51 = vld [vmem:[%s39 + $0x2c] sm:$0xf]
  %v52 = vld [vmem:[%s39 + $0x30] sm:$0xf]
  %v53 = vld [vmem:[%s39 + $0x34] sm:$0xf]
  %v54 = vld [vmem:[%s39 + $0x38] sm:$0xf]
  %v55 = vld [vmem:[%s39 + $0x3c] sm:$0xf]
  %v56 = vld [vmem:[#allocation2] sm:$0xff]
  %v57 = vld [vmem:[#allocation2 + $0x8] sm:$0xff]
  %v58 = vld [vmem:[#allocation2 + $0x10] sm:$0xff]
  %v59 = vld [vmem:[#allocation2 + $0x18] sm:$0xff]
  %v60 = vld [vmem:[#allocation2 + $0x20] sm:$0xff]
  %v61 = vld [vmem:[#allocation2 + $0x28] sm:$0xff]
  %v62 = vld [vmem:[#allocation2 + $0x30] sm:$0xff]
  %v63 = vld [vmem:[#allocation2 + $0x38] sm:$0xff]
  %v64 = vld [vmem:[#allocation2 + $0x40] sm:$0xff]
  %v65 = vld [vmem:[#allocation2 + $0x48] sm:$0xff]
  %v66 = vld [vmem:[#allocation2 + $0x50] sm:$0xff]
  %v67 = vld [vmem:[#allocation2 + $0x58] sm:$0xff]
  %v68 = vld [vmem:[#allocation2 + $0x60] sm:$0xff]
  %v69 = vld [vmem:[#allocation2 + $0x68] sm:$0xff]
  %v70 = vld [vmem:[#allocation2 + $0x70] sm:$0xff]
  %v71 = vld [vmem:[#allocation2 + $0x78] sm:$0xff]
  %v72 = vld [vmem:[%s0] sm:$0xf]
  %v73 = vld [vmem:[%s0 + $0x4] sm:$0xf]
  %v74 = vld [vmem:[%s0 + $0x8] sm:$0xf]
  %v75 = vld [vmem:[%s0 + $0xc] sm:$0xf]
  %v76 = vld [vmem:[%s0 + $0x10] sm:$0xf]
  %v77 = vld [vmem:[%s0 + $0x14] sm:$0xf]
  %v78 = vld [vmem:[%s0 + $0x18] sm:$0xf]
  %v79 = vld [vmem:[%s0 + $0x1c] sm:$0xf]
  %v80 = vld [vmem:[%s0 + $0x20] sm:$0xf]
  %v81 = vld [vmem:[%s0 + $0x24] sm:$0xf]
  %v82 = vld [vmem:[%s0 + $0x28] sm:$0xf]
  %v83 = vld [vmem:[%s0 + $0x2c] sm:$0xf]
  %v84 = vld [vmem:[%s0 + $0x30] sm:$0xf]
  %v85 = vld [vmem:[%s0 + $0x34] sm:$0xf]
  %v86 = vld [vmem:[%s0 + $0x38] sm:$0xf]
  %v87 = vld [vmem:[%s0 + $0x3c] sm:$0xf]
  %v104 = vunpack.c.l.b16 %v72
  %v105 = vunpack.c.l.b16 %v73
  %v106 = vunpack.c.l.b16 %v74
  %v107 = vunpack.c.l.b16 %v75
  %v108 = vunpack.c.l.b16 %v76
  %v109 = vunpack.c.l.b16 %v77
  %v110 = vunpack.c.l.b16 %v78
  %v111 = vunpack.c.l.b16 %v79
  %v112 = vunpack.c.l.b16 %v80
  %v113 = vunpack.c.l.b16 %v81
  %v114 = vunpack.c.l.b16 %v82
  %v115 = vunpack.c.l.b16 %v83
  %v116 = vunpack.c.l.b16 %v84
  %v117 = vunpack.c.l.b16 %v85
  %v118 = vunpack.c.l.b16 %v86
  %v119 = vunpack.c.l.b16 %v87
  %v120 = vpack.c.b16 %v105, %v104
  %v121 = vpack.c.b16 %v107, %v106
  %v122 = vpack.c.b16 %v109, %v108
  %v123 = vpack.c.b16 %v111, %v110
  %v124 = vpack.c.b16 %v113, %v112
  %v125 = vpack.c.b16 %v115, %v114
  %v126 = vpack.c.b16 %v117, %v116
  %v127 = vpack.c.b16 %v119, %v118
  %v152 = vunpack.c.l.b16 %v40
  %v153 = vunpack.c.l.b16 %v41
  %v154 = vunpack.c.l.b16 %v42
  %v155 = vunpack.c.l.b16 %v43
  %v156 = vunpack.c.l.b16 %v44
  %v157 = vunpack.c.l.b16 %v45
  %v158 = vunpack.c.l.b16 %v46
  %v159 = vunpack.c.l.b16 %v47
  %v160 = vunpack.c.l.b16 %v48
  %v161 = vunpack.c.l.b16 %v49
  %v162 = vunpack.c.l.b16 %v50
  %v163 = vunpack.c.l.b16 %v51
  %v164 = vunpack.c.l.b16 %v52
  %v165 = vunpack.c.l.b16 %v53
  %v166 = vunpack.c.l.b16 %v54
  %v167 = vunpack.c.l.b16 %v55
  %v168 = vpack.c.b16 %v153, %v152
  %v169 = vpack.c.b16 %v155, %v154
  %v170 = vpack.c.b16 %v157, %v156
  %v171 = vpack.c.b16 %v159, %v158
  %v172 = vpack.c.b16 %v161, %v160
  %v173 = vpack.c.b16 %v163, %v162
  %v174 = vpack.c.b16 %v165, %v164
  %v175 = vpack.c.b16 %v167, %v166
  %184 = vmatprep.subr.bf16.mxu0 0
  %185 = vmatpush1.bf16.msra.mxu0 %v175
  %186 = vmatprep.subr.bf16.mxu0 0
  %187 = vmatpush1.bf16.msra.mxu0 %v174
  %188 = vmatprep.subr.bf16.mxu0 0
  %189 = vmatpush1.bf16.msra.mxu0 %v173
  %190 = vmatprep.subr.bf16.mxu0 0
  %191 = vmatpush1.bf16.msra.mxu0 %v172
  %192 = vmatprep.subr.bf16.mxu0 0
  %193 = vmatpush1.bf16.msra.mxu0 %v171
  %194 = vmatprep.subr.bf16.mxu0 0
  %195 = vmatpush1.bf16.msra.mxu0 %v170
  %196 = vmatprep.subr.bf16.mxu0 0
  %197 = vmatpush1.bf16.msra.mxu0 %v169
  %198 = vmatprep.subr.bf16.mxu0 0
  %199 = vmatpush1.bf16.msra.mxu0 %v168
  %200 = vmatprep.subr.bf16.mxu0 0
  %201 = vmatpush2.bf16.msra.mxu0 0
  %202 = vmatprep.subr.bf16.mxu0 0
  %203 = vmatpush2.bf16.msra.mxu0 0
  %204 = vmatprep.subr.bf16.mxu0 0
  %205 = vmatpush2.bf16.msra.mxu0 0
  %206 = vmatprep.subr.bf16.mxu0 0
  %207 = vmatpush2.bf16.msra.mxu0 0
  %208 = vmatprep.subr.bf16.mxu0 0
  %209 = vmatpush2.bf16.msra.mxu0 0
  %210 = vmatprep.subr.bf16.mxu0 0
  %211 = vmatpush2.bf16.msra.mxu0 0
  %212 = vmatprep.subr.bf16.mxu0 0
  %213 = vmatpush2.bf16.msra.mxu0 0
  %214 = vmatprep.subr.bf16.mxu0 0
  %215 = vmatpush2.bf16.msra.mxu0 0
  %216 = vmatprep.mubr.bf16.mxu0 0
  %217 = vmatmul.mubr.bf16.gmra.mxu0 %v120
  %v218 = vpop.f32.mrf.mxu0
  %v219 = vadd.f32 0.0, %v218
  %v220 = vpop.f32.mrf.mxu0
  %v221 = vpop.f32.mrf.mxu0
  %v222 = vadd.f32 0.0, %v221
  %v223 = vpop.f32.mrf.mxu0
  %224 = vmatprep.mubr.bf16.mxu0 0
  %225 = vmatmul.mubr.bf16.gmra.mxu0 %v121
  %v226 = vpop.f32.mrf.mxu0
  %v227 = vadd.f32 0.0, %v226
  %v228 = vpop.f32.mrf.mxu0
  %v229 = vpop.f32.mrf.mxu0
  %v230 = vadd.f32 0.0, %v229
  %v231 = vpop.f32.mrf.mxu0
  %232 = vmatprep.mubr.bf16.mxu0 0
  %233 = vmatmul.mubr.bf16.gmra.mxu0 %v122
  %v234 = vpop.f32.mrf.mxu0
  %v235 = vadd.f32 0.0, %v234
  %v236 = vpop.f32.mrf.mxu0
  %v237 = vpop.f32.mrf.mxu0
  %v238 = vadd.f32 0.0, %v237
  %v239 = vpop.f32.mrf.mxu0
  %240 = vmatprep.mubr.bf16.mxu0 0
  %241 = vmatmul.mubr.bf16.gmra.mxu0 %v123
  %v242 = vpop.f32.mrf.mxu0
  %v243 = vadd.f32 0.0, %v242
  %v244 = vpop.f32.mrf.mxu0
  %v245 = vpop.f32.mrf.mxu0
  %v246 = vadd.f32 0.0, %v245
  %v247 = vpop.f32.mrf.mxu0
  %248 = vmatprep.mubr.bf16.mxu0 0
  %249 = vmatmul.mubr.bf16.gmra.mxu0 %v124
  %v250 = vpop.f32.mrf.mxu0
  %v251 = vadd.f32 0.0, %v250
  %v252 = vpop.f32.mrf.mxu0
  %v253 = vpop.f32.mrf.mxu0
  %v254 = vadd.f32 0.0, %v253
  %v255 = vpop.f32.mrf.mxu0
  %256 = vmatprep.mubr.bf16.mxu0 0
  %257 = vmatmul.mubr.bf16.gmra.mxu0 %v125
  %v258 = vpop.f32.mrf.mxu0
  %v259 = vadd.f32 0.0, %v258
  %v260 = vpop.f32.mrf.mxu0
  %v261 = vpop.f32.mrf.mxu0
  %v262 = vadd.f32 0.0, %v261
  %v263 = vpop.f32.mrf.mxu0
  %264 = vmatprep.mubr.bf16.mxu0 0
  %265 = vmatmul.mubr.bf16.gmra.mxu0 %v126
  %v266 = vpop.f32.mrf.mxu0
  %v267 = vadd.f32 0.0, %v266
  %v268 = vpop.f32.mrf.mxu0
  %v269 = vpop.f32.mrf.mxu0
  %v270 = vadd.f32 0.0, %v269
  %v271 = vpop.f32.mrf.mxu0
  %272 = vmatprep.mubr.bf16.mxu0 0
  %273 = vmatmul.mubr.bf16.gmra.mxu0 %v127
  %v274 = vpop.f32.mrf.mxu0
  %v275 = vadd.f32 0.0, %v274
  %v276 = vpop.f32.mrf.mxu0
  %v277 = vpop.f32.mrf.mxu0
  %v278 = vadd.f32 0.0, %v277
  %v279 = vpop.f32.mrf.mxu0
  %280 = vdwg.mxu0
  %v281 = vadd.f32 %v56, %v219
  %v282 = vadd.f32 %v57, %v222
  %v283 = vadd.f32 %v58, %v227
  %v284 = vadd.f32 %v59, %v230
  %v285 = vadd.f32 %v60, %v235
  %v286 = vadd.f32 %v61, %v238
  %v287 = vadd.f32 %v62, %v243
  %v288 = vadd.f32 %v63, %v246
  %v289 = vadd.f32 %v64, %v251
  %v290 = vadd.f32 %v65, %v254
  %v291 = vadd.f32 %v66, %v259
  %v292 = vadd.f32 %v67, %v262
  %v293 = vadd.f32 %v68, %v267
  %v294 = vadd.f32 %v69, %v270
  %v295 = vadd.f32 %v70, %v275
  %v296 = vadd.f32 %v71, %v278
  %297 = vst [vmem:[#allocation2] sm:$0xff] %v281
  %298 = vst [vmem:[#allocation2 + $0x8] sm:$0xff] %v282
  %299 = vst [vmem:[#allocation2 + $0x10] sm:$0xff] %v283
  %300 = vst [vmem:[#allocation2 + $0x18] sm:$0xff] %v284
  %301 = vst [vmem:[#allocation2 + $0x20] sm:$0xff] %v285
  %302 = vst [vmem:[#allocation2 + $0x28] sm:$0xff] %v286
  %303 = vst [vmem:[#allocation2 + $0x30] sm:$0xff] %v287
  %304 = vst [vmem:[#allocation2 + $0x38] sm:$0xff] %v288
  %305 = vst [vmem:[#allocation2 + $0x40] sm:$0xff] %v289
  %306 = vst [vmem:[#allocation2 + $0x48] sm:$0xff] %v290
  %307 = vst [vmem:[#allocation2 + $0x50] sm:$0xff] %v291
  %308 = vst [vmem:[#allocation2 + $0x58] sm:$0xff] %v292
  %309 = vst [vmem:[#allocation2 + $0x60] sm:$0xff] %v293
  %310 = vst [vmem:[#allocation2 + $0x68] sm:$0xff] %v294
  %311 = vst [vmem:[#allocation2 + $0x70] sm:$0xff] %v295
  %312 = vst [vmem:[#allocation2 + $0x78] sm:$0xff] %v296
  // Predicated region
  $region18: #{gcn_forward.5} parent=0 // pred_check
    %p313 = pneg %p15
  $region19: #{gcn_forward.5} parent=0 // pred_check_branch
    %315 = sbr.rel (%p313) target = $region21
  $region20: #{gcn_forward.5} parent=0 // pred_region
    %v316 = vld [vmem:[#allocation2] sm:$0xff]
    %v317 = vld [vmem:[#allocation2 + $0x8] sm:$0xff]
    %v318 = vld [vmem:[#allocation2 + $0x10] sm:$0xff]
    %v319 = vld [vmem:[#allocation2 + $0x18] sm:$0xff]
    %v320 = vld [vmem:[#allocation2 + $0x20] sm:$0xff]
    %v321 = vld [vmem:[#allocation2 + $0x28] sm:$0xff]
    %v322 = vld [vmem:[#allocation2 + $0x30] sm:$0xff]
    %v323 = vld [vmem:[#allocation2 + $0x38] sm:$0xff]
    %v324 = vld [vmem:[#allocation2 + $0x40] sm:$0xff]
    %v325 = vld [vmem:[#allocation2 + $0x48] sm:$0xff]
    %v326 = vld [vmem:[#allocation2 + $0x50] sm:$0xff]
    %v327 = vld [vmem:[#allocation2 + $0x58] sm:$0xff]
    %v328 = vld [vmem:[#allocation2 + $0x60] sm:$0xff]
    %v329 = vld [vmem:[#allocation2 + $0x68] sm:$0xff]
    %v330 = vld [vmem:[#allocation2 + $0x70] sm:$0xff]
    %v331 = vld [vmem:[#allocation2 + $0x78] sm:$0xff]
    %v332 = vld [vmem:[%s2] sm:$0x1]
    %v334 = vlaneseq
    %v335 = vshrl.u32 %v334, 7
    %v336 = vsub.s32 0, %v335
    %v337 = vrot.slane %v332, %v336
    %v339 = vadd.f32 %v316, %v337
    %v340 = vadd.f32 %v317, %v337
    %v341 = vadd.f32 %v318, %v337
    %v342 = vadd.f32 %v319, %v337
    %v343 = vadd.f32 %v320, %v337
    %v344 = vadd.f32 %v321, %v337
    %v345 = vadd.f32 %v322, %v337
    %v346 = vadd.f32 %v323, %v337
    %v347 = vadd.f32 %v324, %v337
    %v348 = vadd.f32 %v325, %v337
    %v349 = vadd.f32 %v326, %v337
    %v350 = vadd.f32 %v327, %v337
    %v351 = vadd.f32 %v328, %v337
    %v352 = vadd.f32 %v329, %v337
    %v353 = vadd.f32 %v330, %v337
    %v354 = vadd.f32 %v331, %v337
    %355 = vst [vmem:[%s3] sm:$0xff] %v339
    %356 = vst [vmem:[%s3 + $0x8] sm:$0xff] %v340
    %357 = vst [vmem:[%s3 + $0x10] sm:$0xff] %v341
    %358 = vst [vmem:[%s3 + $0x18] sm:$0xff] %v342
    %359 = vst [vmem:[%s3 + $0x20] sm:$0xff] %v343
    %360 = vst [vmem:[%s3 + $0x28] sm:$0xff] %v344
    %361 = vst [vmem:[%s3 + $0x30] sm:$0xff] %v345
    %362 = vst [vmem:[%s3 + $0x38] sm:$0xff] %v346
    %363 = vst [vmem:[%s3 + $0x40] sm:$0xff] %v347
    %364 = vst [vmem:[%s3 + $0x48] sm:$0xff] %v348
    %365 = vst [vmem:[%s3 + $0x50] sm:$0xff] %v349
    %366 = vst [vmem:[%s3 + $0x58] sm:$0xff] %v350
    %367 = vst [vmem:[%s3 + $0x60] sm:$0xff] %v351
    %368 = vst [vmem:[%s3 + $0x68] sm:$0xff] %v352
    %369 = vst [vmem:[%s3 + $0x70] sm:$0xff] %v353
    %370 = vst [vmem:[%s3 + $0x78] sm:$0xff] %v354
  $region21: #{gcn_forward.5} parent=0 // pred_fallthru
    _
  // Predicated region
  $region22: #{gcn_forward.5} parent=0 // pred_check
    _
  $region23: #{gcn_forward.5} parent=0 // pred_check_branch
    %372 = sbr.rel (0) target = $region25
  $region24: #{gcn_forward.5} parent=0 // pred_region
    _
  $region25: #{gcn_forward.5} parent=0 // pred_fallthru
    _
  // Predicated region
  $region26: #{gcn_forward.5} parent=0 // pred_check
    _
  $region27: #{gcn_forward.5} parent=0 // pred_check_branch
    %374 = sbr.rel (0) target = $region29
  $region28: #{gcn_forward.5} parent=0 // pred_region
    _
  $region29: #{gcn_forward.5} parent=0 // pred_fallthru
    _

// kernel: gcn_forward.3
$region0: #{gcn_forward.3}
  #allocation0 [shape = 'u32[]', space=smem, size = 0x4, offset = 0x4, fixed_abs, tag = 'smem constant byte address 0x4 - core index']
  #allocation1 [shape = 'u32[144,128]{1,0:T(1,128)}', space=vmem, size = 0x12000, scoped, tag = 'internal scratch']
  %s0 = inlined_call_operand.vmem [shape: bf16[128,128], index: 0, kind: input, shape index: {}]
  %s1 = inlined_call_operand.vmem [shape: bf16[128,128], index: 1, kind: input, shape index: {}]
  %s2 = inlined_call_operand.vmem [shape: bf16[128,128], index: 2, kind: output, shape index: {}]
  %s3 = sld [smem:[#allocation0]]
  $region18: #{gcn_forward.3} parent=0
    _
  %s5 = ssub.s32 1, %s3
  %s6 = scalar_select 0, %s5, %s3
  // Predicated region
  $region2: #{gcn_forward.3} parent=0 // pred_check
    _
  $region3: #{gcn_forward.3} parent=0 // pred_check_branch
    %8 = sbr.rel (0) target = $region5
  $region4: #{gcn_forward.3} parent=0 // pred_region
    _
  $region5: #{gcn_forward.3} parent=0 // pred_fallthru
    _
  // Predicated region
  $region6: #{gcn_forward.3} parent=0 // pred_check
    _
  $region7: #{gcn_forward.3} parent=0 // pred_check_branch
    %10 = sbr.rel (0) target = $region9
  $region8: #{gcn_forward.3} parent=0 // pred_region
    _
  $region9: #{gcn_forward.3} parent=0 // pred_fallthru
    _
  %v12 = vld [vmem:[%s0] sm:$0xf]
  %v13 = vld [vmem:[%s0 + $0x4] sm:$0xf]
  %v14 = vld [vmem:[%s0 + $0x8] sm:$0xf]
  %v15 = vld [vmem:[%s0 + $0xc] sm:$0xf]
  %v16 = vld [vmem:[%s0 + $0x10] sm:$0xf]
  %v17 = vld [vmem:[%s0 + $0x14] sm:$0xf]
  %v18 = vld [vmem:[%s0 + $0x18] sm:$0xf]
  %v19 = vld [vmem:[%s0 + $0x1c] sm:$0xf]
  %v20 = vld [vmem:[%s0 + $0x20] sm:$0xf]
  %v21 = vld [vmem:[%s0 + $0x24] sm:$0xf]
  %v22 = vld [vmem:[%s0 + $0x28] sm:$0xf]
  %v23 = vld [vmem:[%s0 + $0x2c] sm:$0xf]
  %v24 = vld [vmem:[%s0 + $0x30] sm:$0xf]
  %v25 = vld [vmem:[%s0 + $0x34] sm:$0xf]
  %v26 = vld [vmem:[%s0 + $0x38] sm:$0xf]
  %v27 = vld [vmem:[%s0 + $0x3c] sm:$0xf]
  %v28 = vld [vmem:[%s1] sm:$0xf]
  %v29 = vld [vmem:[%s1 + $0x4] sm:$0xf]
  %v30 = vld [vmem:[%s1 + $0x8] sm:$0xf]
  %v31 = vld [vmem:[%s1 + $0xc] sm:$0xf]
  %v32 = vld [vmem:[%s1 + $0x10] sm:$0xf]
  %v33 = vld [vmem:[%s1 + $0x14] sm:$0xf]
  %v34 = vld [vmem:[%s1 + $0x18] sm:$0xf]
  %v35 = vld [vmem:[%s1 + $0x1c] sm:$0xf]
  %v36 = vld [vmem:[%s1 + $0x20] sm:$0xf]
  %v37 = vld [vmem:[%s1 + $0x24] sm:$0xf]
  %v38 = vld [vmem:[%s1 + $0x28] sm:$0xf]
  %v39 = vld [vmem:[%s1 + $0x2c] sm:$0xf]
  %v40 = vld [vmem:[%s1 + $0x30] sm:$0xf]
  %v41 = vld [vmem:[%s1 + $0x34] sm:$0xf]
  %v42 = vld [vmem:[%s1 + $0x38] sm:$0xf]
  %v43 = vld [vmem:[%s1 + $0x3c] sm:$0xf]
  %v60 = vunpack.c.l.b16 %v12
  %v61 = vunpack.c.l.b16 %v13
  %v62 = vunpack.c.l.b16 %v14
  %v63 = vunpack.c.l.b16 %v15
  %v64 = vunpack.c.l.b16 %v16
  %v65 = vunpack.c.l.b16 %v17
  %v66 = vunpack.c.l.b16 %v18
  %v67 = vunpack.c.l.b16 %v19
  %v68 = vunpack.c.l.b16 %v20
  %v69 = vunpack.c.l.b16 %v21
  %v70 = vunpack.c.l.b16 %v22
  %v71 = vunpack.c.l.b16 %v23
  %v72 = vunpack.c.l.b16 %v24
  %v73 = vunpack.c.l.b16 %v25
  %v74 = vunpack.c.l.b16 %v26
  %v75 = vunpack.c.l.b16 %v27
  %v76 = vpack.c.b16 %v61, %v60
  %v77 = vpack.c.b16 %v63, %v62
  %v78 = vpack.c.b16 %v65, %v64
  %v79 = vpack.c.b16 %v67, %v66
  %v80 = vpack.c.b16 %v69, %v68
  %v81 = vpack.c.b16 %v71, %v70
  %v82 = vpack.c.b16 %v73, %v72
  %v83 = vpack.c.b16 %v75, %v74
  %v108 = vunpack.c.l.b16 %v28
  %v109 = vunpack.c.l.b16 %v29
  %v110 = vunpack.c.l.b16 %v30
  %v111 = vunpack.c.l.b16 %v31
  %v112 = vunpack.c.l.b16 %v32
  %v113 = vunpack.c.l.b16 %v33
  %v114 = vunpack.c.l.b16 %v34
  %v115 = vunpack.c.l.b16 %v35
  %v116 = vunpack.c.l.b16 %v36
  %v117 = vunpack.c.l.b16 %v37
  %v118 = vunpack.c.l.b16 %v38
  %v119 = vunpack.c.l.b16 %v39
  %v120 = vunpack.c.l.b16 %v40
  %v121 = vunpack.c.l.b16 %v41
  %v122 = vunpack.c.l.b16 %v42
  %v123 = vunpack.c.l.b16 %v43
  %v124 = vpack.c.b16 %v109, %v108
  %v125 = vpack.c.b16 %v111, %v110
  %v126 = vpack.c.b16 %v113, %v112
  %v127 = vpack.c.b16 %v115, %v114
  %v128 = vpack.c.b16 %v117, %v116
  %v129 = vpack.c.b16 %v119, %v118
  %v130 = vpack.c.b16 %v121, %v120
  %v131 = vpack.c.b16 %v123, %v122
  %140 = vmatprep.subr.bf16.mxu0 0
  %141 = vmatpush1.bf16.msra.mxu0 %v131
  %142 = vmatprep.subr.bf16.mxu0 0
  %143 = vmatpush1.bf16.msra.mxu0 %v130
  %144 = vmatprep.subr.bf16.mxu0 0
  %145 = vmatpush1.bf16.msra.mxu0 %v129
  %146 = vmatprep.subr.bf16.mxu0 0
  %147 = vmatpush1.bf16.msra.mxu0 %v128
  %148 = vmatprep.subr.bf16.mxu0 0
  %149 = vmatpush1.bf16.msra.mxu0 %v127
  %150 = vmatprep.subr.bf16.mxu0 0
  %151 = vmatpush1.bf16.msra.mxu0 %v126
  %152 = vmatprep.subr.bf16.mxu0 0
  %153 = vmatpush1.bf16.msra.mxu0 %v125
  %154 = vmatprep.subr.bf16.mxu0 0
  %155 = vmatpush1.bf16.msra.mxu0 %v124
  %156 = vmatprep.subr.bf16.mxu0 0
  %157 = vmatpush2.bf16.msra.mxu0 0
  %158 = vmatprep.subr.bf16.mxu0 0
  %159 = vmatpush2.bf16.msra.mxu0 0
  %160 = vmatprep.subr.bf16.mxu0 0
  %161 = vmatpush2.bf16.msra.mxu0 0
  %162 = vmatprep.subr.bf16.mxu0 0
  %163 = vmatpush2.bf16.msra.mxu0 0
  %164 = vmatprep.subr.bf16.mxu0 0
  %165 = vmatpush2.bf16.msra.mxu0 0
  %166 = vmatprep.subr.bf16.mxu0 0
  %167 = vmatpush2.bf16.msra.mxu0 0
  %168 = vmatprep.subr.bf16.mxu0 0
  %169 = vmatpush2.bf16.msra.mxu0 0
  %170 = vmatprep.subr.bf16.mxu0 0
  %171 = vmatpush2.bf16.msra.mxu0 0
  %172 = vmatprep.mubr.bf16.mxu0 0
  %173 = vmatmul.mubr.bf16.gmra.mxu0 %v76
  %v174 = vpop.f32.mrf.mxu0
  %v175 = vadd.f32 0.0, %v174
  %v176 = vpop.f32.mrf.mxu0
  %v177 = vpop.f32.mrf.mxu0
  %v178 = vadd.f32 0.0, %v177
  %v179 = vpop.f32.mrf.mxu0
  %180 = vmatprep.mubr.bf16.mxu0 0
  %181 = vmatmul.mubr.bf16.gmra.mxu0 %v77
  %v182 = vpop.f32.mrf.mxu0
  %v183 = vadd.f32 0.0, %v182
  %v184 = vpop.f32.mrf.mxu0
  %v185 = vpop.f32.mrf.mxu0
  %v186 = vadd.f32 0.0, %v185
  %v187 = vpop.f32.mrf.mxu0
  %188 = vmatprep.mubr.bf16.mxu0 0
  %189 = vmatmul.mubr.bf16.gmra.mxu0 %v78
  %v190 = vpop.f32.mrf.mxu0
  %v191 = vadd.f32 0.0, %v190
  %v192 = vpop.f32.mrf.mxu0
  %v193 = vpop.f32.mrf.mxu0
  %v194 = vadd.f32 0.0, %v193
  %v195 = vpop.f32.mrf.mxu0
  %196 = vmatprep.mubr.bf16.mxu0 0
  %197 = vmatmul.mubr.bf16.gmra.mxu0 %v79
  %v198 = vpop.f32.mrf.mxu0
  %v199 = vadd.f32 0.0, %v198
  %v200 = vpop.f32.mrf.mxu0
  %v201 = vpop.f32.mrf.mxu0
  %v202 = vadd.f32 0.0, %v201
  %v203 = vpop.f32.mrf.mxu0
  %204 = vmatprep.mubr.bf16.mxu0 0
  %205 = vmatmul.mubr.bf16.gmra.mxu0 %v80
  %v206 = vpop.f32.mrf.mxu0
  %v207 = vadd.f32 0.0, %v206
  %v208 = vpop.f32.mrf.mxu0
  %v209 = vpop.f32.mrf.mxu0
  %v210 = vadd.f32 0.0, %v209
  %v211 = vpop.f32.mrf.mxu0
  %212 = vmatprep.mubr.bf16.mxu0 0
  %213 = vmatmul.mubr.bf16.gmra.mxu0 %v81
  %v214 = vpop.f32.mrf.mxu0
  %v215 = vadd.f32 0.0, %v214
  %v216 = vpop.f32.mrf.mxu0
  %v217 = vpop.f32.mrf.mxu0
  %v218 = vadd.f32 0.0, %v217
  %v219 = vpop.f32.mrf.mxu0
  %220 = vmatprep.mubr.bf16.mxu0 0
  %221 = vmatmul.mubr.bf16.gmra.mxu0 %v82
  %v222 = vpop.f32.mrf.mxu0
  %v223 = vadd.f32 0.0, %v222
  %v224 = vpop.f32.mrf.mxu0
  %v225 = vpop.f32.mrf.mxu0
  %v226 = vadd.f32 0.0, %v225
  %v227 = vpop.f32.mrf.mxu0
  %228 = vmatprep.mubr.bf16.mxu0 0
  %229 = vmatmul.mubr.bf16.gmra.mxu0 %v83
  %v230 = vpop.f32.mrf.mxu0
  %v231 = vadd.f32 0.0, %v230
  %v232 = vpop.f32.mrf.mxu0
  %v233 = vpop.f32.mrf.mxu0
  %v234 = vadd.f32 0.0, %v233
  %v235 = vpop.f32.mrf.mxu0
  %236 = vdwg.mxu0
  %v237 = vpack.c.bf16 %v178, %v175
  %v238 = vpack.c.bf16 %v186, %v183
  %v239 = vpack.c.bf16 %v194, %v191
  %v240 = vpack.c.bf16 %v202, %v199
  %v241 = vpack.c.bf16 %v210, %v207
  %v242 = vpack.c.bf16 %v218, %v215
  %v243 = vpack.c.bf16 %v226, %v223
  %v244 = vpack.c.bf16 %v234, %v231
  %v253 = vunpack.c.l.b16 %v237
  %v254 = vunpack.c.h.b16 %v237
  %v255 = vunpack.c.l.b16 %v238
  %v256 = vunpack.c.h.b16 %v238
  %v257 = vunpack.c.l.b16 %v239
  %v258 = vunpack.c.h.b16 %v239
  %v259 = vunpack.c.l.b16 %v240
  %v260 = vunpack.c.h.b16 %v240
  %v261 = vunpack.c.l.b16 %v241
  %v262 = vunpack.c.h.b16 %v241
  %v263 = vunpack.c.l.b16 %v242
  %v264 = vunpack.c.h.b16 %v242
  %v265 = vunpack.c.l.b16 %v243
  %v266 = vunpack.c.h.b16 %v243
  %v267 = vunpack.c.l.b16 %v244
  %v268 = vunpack.c.h.b16 %v244
  %v269 = vpack.c.b16 %v253, %v253
  %v270 = vpack.c.b16 %v254, %v254
  %v271 = vpack.c.b16 %v255, %v255
  %v272 = vpack.c.b16 %v256, %v256
  %v273 = vpack.c.b16 %v257, %v257
  %v274 = vpack.c.b16 %v258, %v258
  %v275 = vpack.c.b16 %v259, %v259
  %v276 = vpack.c.b16 %v260, %v260
  %v277 = vpack.c.b16 %v261, %v261
  %v278 = vpack.c.b16 %v262, %v262
  %v279 = vpack.c.b16 %v263, %v263
  %v280 = vpack.c.b16 %v264, %v264
  %v281 = vpack.c.b16 %v265, %v265
  %v282 = vpack.c.b16 %v266, %v266
  %v283 = vpack.c.b16 %v267, %v267
  %v284 = vpack.c.b16 %v268, %v268
  %301 = vst [vmem:[%s2] sm:$0xf] %v269
  %302 = vst [vmem:[%s2 + $0x4] sm:$0xf] %v270
  %303 = vst [vmem:[%s2 + $0x8] sm:$0xf] %v271
  %304 = vst [vmem:[%s2 + $0xc] sm:$0xf] %v272
  %305 = vst [vmem:[%s2 + $0x10] sm:$0xf] %v273
  %306 = vst [vmem:[%s2 + $0x14] sm:$0xf] %v274
  %307 = vst [vmem:[%s2 + $0x18] sm:$0xf] %v275
  %308 = vst [vmem:[%s2 + $0x1c] sm:$0xf] %v276
  %309 = vst [vmem:[%s2 + $0x20] sm:$0xf] %v277
  %310 = vst [vmem:[%s2 + $0x24] sm:$0xf] %v278
  %311 = vst [vmem:[%s2 + $0x28] sm:$0xf] %v279
  %312 = vst [vmem:[%s2 + $0x2c] sm:$0xf] %v280
  %313 = vst [vmem:[%s2 + $0x30] sm:$0xf] %v281
  %314 = vst [vmem:[%s2 + $0x34] sm:$0xf] %v282
  %315 = vst [vmem:[%s2 + $0x38] sm:$0xf] %v283
  %316 = vst [vmem:[%s2 + $0x3c] sm:$0xf] %v284
  // Predicated region
  $region10: #{gcn_forward.3} parent=0 // pred_check
    _
  $region11: #{gcn_forward.3} parent=0 // pred_check_branch
    %318 = sbr.rel (0) target = $region13
  $region12: #{gcn_forward.3} parent=0 // pred_region
    _
  $region13: #{gcn_forward.3} parent=0 // pred_fallthru
    _
  // Predicated region
  $region14: #{gcn_forward.3} parent=0 // pred_check
    _
  $region15: #{gcn_forward.3} parent=0 // pred_check_branch
    %320 = sbr.rel (0) target = $region17
  $region16: #{gcn_forward.3} parent=0 // pred_region
    _
  $region17: #{gcn_forward.3} parent=0 // pred_fallthru
    _

// kernel: gcn_forward.4
$region0: #{gcn_forward.4}
  #allocation0 [shape = 'u32[]', space=smem, size = 0x4, offset = 0x4, fixed_abs, tag = 'smem constant byte address 0x4 - core index']
  #allocation1 [shape = 'u32[144,128]{1,0:T(1,128)}', space=vmem, size = 0x12000, scoped, tag = 'internal scratch']
  #allocation2 [shape = 'f32[128,128]{1,0:T(8,128)}', space=vmem, size = 0x10000, scoped, tag = 'scratch operand']
  %s0 = inlined_call_operand.vmem [shape: bf16[128,128], index: 0, kind: input, shape index: {}]
  %s1 = inlined_call_operand.vmem [shape: bf16[128,128], index: 1, kind: input, shape index: {}]
  %s2 = inlined_call_operand.vmem [shape: f32[1,128], index: 2, kind: input, shape index: {}]
  %s3 = inlined_call_operand.vmem [shape: bf16[128,128], index: 3, kind: input, shape index: {}]
  %s4 = inlined_call_operand.vmem [shape: bf16[128,128], index: 4, kind: output, shape index: {}]
  %s5 = sld [smem:[#allocation0]]
  $region34: #{gcn_forward.4} parent=0
    _
  %s7 = ssub.s32 1, %s5
  %s8 = scalar_select 0, %s7, %s5
  // Predicated region
  $region2: #{gcn_forward.4} parent=0 // pred_check
    _
  $region3: #{gcn_forward.4} parent=0 // pred_check_branch
    %10 = sbr.rel (0) target = $region5
  $region4: #{gcn_forward.4} parent=0 // pred_region
    _
  $region5: #{gcn_forward.4} parent=0 // pred_fallthru
    _
  // Predicated region
  $region6: #{gcn_forward.4} parent=0 // pred_check
    _
  $region7: #{gcn_forward.4} parent=0 // pred_check_branch
    %12 = sbr.rel (0) target = $region9
  $region8: #{gcn_forward.4} parent=0 // pred_region
    _
  $region9: #{gcn_forward.4} parent=0 // pred_fallthru
    _
  // Predicated region
  $region10: #{gcn_forward.4} parent=0 // pred_check
    _
  $region11: #{gcn_forward.4} parent=0 // pred_check_branch
    %14 = sbr.rel (0) target = $region13
  $region12: #{gcn_forward.4} parent=0 // pred_region
    _
  $region13: #{gcn_forward.4} parent=0 // pred_fallthru
    _
  // Predicated region
  $region14: #{gcn_forward.4} parent=0 // pred_check
    _
  $region15: #{gcn_forward.4} parent=0 // pred_check_branch
    %16 = sbr.rel (0) target = $region17
  $region16: #{gcn_forward.4} parent=0 // pred_region
    _
  $region17: #{gcn_forward.4} parent=0 // pred_fallthru
    _
  %p18 = scmp.eq.s32.totalorder 0, 0
  // Predicated region
  $region18: #{gcn_forward.4} parent=0 // pred_check
    %p19 = pneg %p18
  $region19: #{gcn_forward.4} parent=0 // pred_check_branch
    %21 = sbr.rel (%p19) target = $region21
  $region20: #{gcn_forward.4} parent=0 // pred_region
    %22 = vst [vmem:[#allocation2] sm:$0xff] 0.0
    %23 = vst [vmem:[#allocation2 + $0x8] sm:$0xff] 0.0
    %24 = vst [vmem:[#allocation2 + $0x10] sm:$0xff] 0.0
    %25 = vst [vmem:[#allocation2 + $0x18] sm:$0xff] 0.0
    %26 = vst [vmem:[#allocation2 + $0x20] sm:$0xff] 0.0
    %27 = vst [vmem:[#allocation2 + $0x28] sm:$0xff] 0.0
    %28 = vst [vmem:[#allocation2 + $0x30] sm:$0xff] 0.0
    %29 = vst [vmem:[#allocation2 + $0x38] sm:$0xff] 0.0
    %30 = vst [vmem:[#allocation2 + $0x40] sm:$0xff] 0.0
    %31 = vst [vmem:[#allocation2 + $0x48] sm:$0xff] 0.0
    %32 = vst [vmem:[#allocation2 + $0x50] sm:$0xff] 0.0
    %33 = vst [vmem:[#allocation2 + $0x58] sm:$0xff] 0.0
    %34 = vst [vmem:[#allocation2 + $0x60] sm:$0xff] 0.0
    %35 = vst [vmem:[#allocation2 + $0x68] sm:$0xff] 0.0
    %36 = vst [vmem:[#allocation2 + $0x70] sm:$0xff] 0.0
    %37 = vst [vmem:[#allocation2 + $0x78] sm:$0xff] 0.0
  $region21: #{gcn_forward.4} parent=0 // pred_fallthru
    _
  %s38 = smul.u32 0, 128
  %s39 = sshra.s32 %s38, 3
  %s40 = sand.u32 %s38, 7
  %s41 = smul.addr %s39, 4
  %s42 = scalar_lea.vmem %s1, %s41
  %v43 = vld [vmem:[%s42] sm:$0xf]
  %v44 = vld [vmem:[%s42 + $0x4] sm:$0xf]
  %v45 = vld [vmem:[%s42 + $0x8] sm:$0xf]
  %v46 = vld [vmem:[%s42 + $0xc] sm:$0xf]
  %v47 = vld [vmem:[%s42 + $0x10] sm:$0xf]
  %v48 = vld [vmem:[%s42 + $0x14] sm:$0xf]
  %v49 = vld [vmem:[%s42 + $0x18] sm:$0xf]
  %v50 = vld [vmem:[%s42 + $0x1c] sm:$0xf]
  %v51 = vld [vmem:[%s42 + $0x20] sm:$0xf]
  %v52 = vld [vmem:[%s42 + $0x24] sm:$0xf]
  %v53 = vld [vmem:[%s42 + $0x28] sm:$0xf]
  %v54 = vld [vmem:[%s42 + $0x2c] sm:$0xf]
  %v55 = vld [vmem:[%s42 + $0x30] sm:$0xf]
  %v56 = vld [vmem:[%s42 + $0x34] sm:$0xf]
  %v57 = vld [vmem:[%s42 + $0x38] sm:$0xf]
  %v58 = vld [vmem:[%s42 + $0x3c] sm:$0xf]
  %v59 = vld [vmem:[#allocation2] sm:$0xff]
  %v60 = vld [vmem:[#allocation2 + $0x8] sm:$0xff]
  %v61 = vld [vmem:[#allocation2 + $0x10] sm:$0xff]
  %v62 = vld [vmem:[#allocation2 + $0x18] sm:$0xff]
  %v63 = vld [vmem:[#allocation2 + $0x20] sm:$0xff]
  %v64 = vld [vmem:[#allocation2 + $0x28] sm:$0xff]
  %v65 = vld [vmem:[#allocation2 + $0x30] sm:$0xff]
  %v66 = vld [vmem:[#allocation2 + $0x38] sm:$0xff]
  %v67 = vld [vmem:[#allocation2 + $0x40] sm:$0xff]
  %v68 = vld [vmem:[#allocation2 + $0x48] sm:$0xff]
  %v69 = vld [vmem:[#allocation2 + $0x50] sm:$0xff]
  %v70 = vld [vmem:[#allocation2 + $0x58] sm:$0xff]
  %v71 = vld [vmem:[#allocation2 + $0x60] sm:$0xff]
  %v72 = vld [vmem:[#allocation2 + $0x68] sm:$0xff]
  %v73 = vld [vmem:[#allocation2 + $0x70] sm:$0xff]
  %v74 = vld [vmem:[#allocation2 + $0x78] sm:$0xff]
  %v75 = vld [vmem:[%s0] sm:$0xf]
  %v76 = vld [vmem:[%s0 + $0x4] sm:$0xf]
  %v77 = vld [vmem:[%s0 + $0x8] sm:$0xf]
  %v78 = vld [vmem:[%s0 + $0xc] sm:$0xf]
  %v79 = vld [vmem:[%s0 + $0x10] sm:$0xf]
  %v80 = vld [vmem:[%s0 + $0x14] sm:$0xf]
  %v81 = vld [vmem:[%s0 + $0x18] sm:$0xf]
  %v82 = vld [vmem:[%s0 + $0x1c] sm:$0xf]
  %v83 = vld [vmem:[%s0 + $0x20] sm:$0xf]
  %v84 = vld [vmem:[%s0 + $0x24] sm:$0xf]
  %v85 = vld [vmem:[%s0 + $0x28] sm:$0xf]
  %v86 = vld [vmem:[%s0 + $0x2c] sm:$0xf]
  %v87 = vld [vmem:[%s0 + $0x30] sm:$0xf]
  %v88 = vld [vmem:[%s0 + $0x34] sm:$0xf]
  %v89 = vld [vmem:[%s0 + $0x38] sm:$0xf]
  %v90 = vld [vmem:[%s0 + $0x3c] sm:$0xf]
  %v107 = vunpack.c.l.b16 %v75
  %v108 = vunpack.c.l.b16 %v76
  %v109 = vunpack.c.l.b16 %v77
  %v110 = vunpack.c.l.b16 %v78
  %v111 = vunpack.c.l.b16 %v79
  %v112 = vunpack.c.l.b16 %v80
  %v113 = vunpack.c.l.b16 %v81
  %v114 = vunpack.c.l.b16 %v82
  %v115 = vunpack.c.l.b16 %v83
  %v116 = vunpack.c.l.b16 %v84
  %v117 = vunpack.c.l.b16 %v85
  %v118 = vunpack.c.l.b16 %v86
  %v119 = vunpack.c.l.b16 %v87
  %v120 = vunpack.c.l.b16 %v88
  %v121 = vunpack.c.l.b16 %v89
  %v122 = vunpack.c.l.b16 %v90
  %v123 = vpack.c.b16 %v108, %v107
  %v124 = vpack.c.b16 %v110, %v109
  %v125 = vpack.c.b16 %v112, %v111
  %v126 = vpack.c.b16 %v114, %v113
  %v127 = vpack.c.b16 %v116, %v115
  %v128 = vpack.c.b16 %v118, %v117
  %v129 = vpack.c.b16 %v120, %v119
  %v130 = vpack.c.b16 %v122, %v121
  %v155 = vunpack.c.l.b16 %v43
  %v156 = vunpack.c.l.b16 %v44
  %v157 = vunpack.c.l.b16 %v45
  %v158 = vunpack.c.l.b16 %v46
  %v159 = vunpack.c.l.b16 %v47
  %v160 = vunpack.c.l.b16 %v48
  %v161 = vunpack.c.l.b16 %v49
  %v162 = vunpack.c.l.b16 %v50
  %v163 = vunpack.c.l.b16 %v51
  %v164 = vunpack.c.l.b16 %v52
  %v165 = vunpack.c.l.b16 %v53
  %v166 = vunpack.c.l.b16 %v54
  %v167 = vunpack.c.l.b16 %v55
  %v168 = vunpack.c.l.b16 %v56
  %v169 = vunpack.c.l.b16 %v57
  %v170 = vunpack.c.l.b16 %v58
  %v171 = vpack.c.b16 %v156, %v155
  %v172 = vpack.c.b16 %v158, %v157
  %v173 = vpack.c.b16 %v160, %v159
  %v174 = vpack.c.b16 %v162, %v161
  %v175 = vpack.c.b16 %v164, %v163
  %v176 = vpack.c.b16 %v166, %v165
  %v177 = vpack.c.b16 %v168, %v167
  %v178 = vpack.c.b16 %v170, %v169
  %187 = vmatprep.subr.bf16.mxu0 0
  %188 = vmatpush1.bf16.msra.mxu0 %v178
  %189 = vmatprep.subr.bf16.mxu0 0
  %190 = vmatpush1.bf16.msra.mxu0 %v177
  %191 = vmatprep.subr.bf16.mxu0 0
  %192 = vmatpush1.bf16.msra.mxu0 %v176
  %193 = vmatprep.subr.bf16.mxu0 0
  %194 = vmatpush1.bf16.msra.mxu0 %v175
  %195 = vmatprep.subr.bf16.mxu0 0
  %196 = vmatpush1.bf16.msra.mxu0 %v174
  %197 = vmatprep.subr.bf16.mxu0 0
  %198 = vmatpush1.bf16.msra.mxu0 %v173
  %199 = vmatprep.subr.bf16.mxu0 0
  %200 = vmatpush1.bf16.msra.mxu0 %v172
  %201 = vmatprep.subr.bf16.mxu0 0
  %202 = vmatpush1.bf16.msra.mxu0 %v171
  %203 = vmatprep.subr.bf16.mxu0 0
  %204 = vmatpush2.bf16.msra.mxu0 0
  %205 = vmatprep.subr.bf16.mxu0 0
  %206 = vmatpush2.bf16.msra.mxu0 0
  %207 = vmatprep.subr.bf16.mxu0 0
  %208 = vmatpush2.bf16.msra.mxu0 0
  %209 = vmatprep.subr.bf16.mxu0 0
  %210 = vmatpush2.bf16.msra.mxu0 0
  %211 = vmatprep.subr.bf16.mxu0 0
  %212 = vmatpush2.bf16.msra.mxu0 0
  %213 = vmatprep.subr.bf16.mxu0 0
  %214 = vmatpush2.bf16.msra.mxu0 0
  %215 = vmatprep.subr.bf16.mxu0 0
  %216 = vmatpush2.bf16.msra.mxu0 0
  %217 = vmatprep.subr.bf16.mxu0 0
  %218 = vmatpush2.bf16.msra.mxu0 0
  %219 = vmatprep.mubr.bf16.mxu0 0
  %220 = vmatmul.mubr.bf16.gmra.mxu0 %v123
  %v221 = vpop.f32.mrf.mxu0
  %v222 = vadd.f32 0.0, %v221
  %v223 = vpop.f32.mrf.mxu0
  %v224 = vpop.f32.mrf.mxu0
  %v225 = vadd.f32 0.0, %v224
  %v226 = vpop.f32.mrf.mxu0
  %227 = vmatprep.mubr.bf16.mxu0 0
  %228 = vmatmul.mubr.bf16.gmra.mxu0 %v124
  %v229 = vpop.f32.mrf.mxu0
  %v230 = vadd.f32 0.0, %v229
  %v231 = vpop.f32.mrf.mxu0
  %v232 = vpop.f32.mrf.mxu0
  %v233 = vadd.f32 0.0, %v232
  %v234 = vpop.f32.mrf.mxu0
  %235 = vmatprep.mubr.bf16.mxu0 0
  %236 = vmatmul.mubr.bf16.gmra.mxu0 %v125
  %v237 = vpop.f32.mrf.mxu0
  %v238 = vadd.f32 0.0, %v237
  %v239 = vpop.f32.mrf.mxu0
  %v240 = vpop.f32.mrf.mxu0
  %v241 = vadd.f32 0.0, %v240
  %v242 = vpop.f32.mrf.mxu0
  %243 = vmatprep.mubr.bf16.mxu0 0
  %244 = vmatmul.mubr.bf16.gmra.mxu0 %v126
  %v245 = vpop.f32.mrf.mxu0
  %v246 = vadd.f32 0.0, %v245
  %v247 = vpop.f32.mrf.mxu0
  %v248 = vpop.f32.mrf.mxu0
  %v249 = vadd.f32 0.0, %v248
  %v250 = vpop.f32.mrf.mxu0
  %251 = vmatprep.mubr.bf16.mxu0 0
  %252 = vmatmul.mubr.bf16.gmra.mxu0 %v127
  %v253 = vpop.f32.mrf.mxu0
  %v254 = vadd.f32 0.0, %v253
  %v255 = vpop.f32.mrf.mxu0
  %v256 = vpop.f32.mrf.mxu0
  %v257 = vadd.f32 0.0, %v256
  %v258 = vpop.f32.mrf.mxu0
  %259 = vmatprep.mubr.bf16.mxu0 0
  %260 = vmatmul.mubr.bf16.gmra.mxu0 %v128
  %v261 = vpop.f32.mrf.mxu0
  %v262 = vadd.f32 0.0, %v261
  %v263 = vpop.f32.mrf.mxu0
  %v264 = vpop.f32.mrf.mxu0
  %v265 = vadd.f32 0.0, %v264
  %v266 = vpop.f32.mrf.mxu0
  %267 = vmatprep.mubr.bf16.mxu0 0
  %268 = vmatmul.mubr.bf16.gmra.mxu0 %v129
  %v269 = vpop.f32.mrf.mxu0
  %v270 = vadd.f32 0.0, %v269
  %v271 = vpop.f32.mrf.mxu0
  %v272 = vpop.f32.mrf.mxu0
  %v273 = vadd.f32 0.0, %v272
  %v274 = vpop.f32.mrf.mxu0
  %275 = vmatprep.mubr.bf16.mxu0 0
  %276 = vmatmul.mubr.bf16.gmra.mxu0 %v130
  %v277 = vpop.f32.mrf.mxu0
  %v278 = vadd.f32 0.0, %v277
  %v279 = vpop.f32.mrf.mxu0
  %v280 = vpop.f32.mrf.mxu0
  %v281 = vadd.f32 0.0, %v280
  %v282 = vpop.f32.mrf.mxu0
  %283 = vdwg.mxu0
  %v284 = vadd.f32 %v59, %v222
  %v285 = vadd.f32 %v60, %v225
  %v286 = vadd.f32 %v61, %v230
  %v287 = vadd.f32 %v62, %v233
  %v288 = vadd.f32 %v63, %v238
  %v289 = vadd.f32 %v64, %v241
  %v290 = vadd.f32 %v65, %v246
  %v291 = vadd.f32 %v66, %v249
  %v292 = vadd.f32 %v67, %v254
  %v293 = vadd.f32 %v68, %v257
  %v294 = vadd.f32 %v69, %v262
  %v295 = vadd.f32 %v70, %v265
  %v296 = vadd.f32 %v71, %v270
  %v297 = vadd.f32 %v72, %v273
  %v298 = vadd.f32 %v73, %v278
  %v299 = vadd.f32 %v74, %v281
  %300 = vst [vmem:[#allocation2] sm:$0xff] %v284
  %301 = vst [vmem:[#allocation2 + $0x8] sm:$0xff] %v285
  %302 = vst [vmem:[#allocation2 + $0x10] sm:$0xff] %v286
  %303 = vst [vmem:[#allocation2 + $0x18] sm:$0xff] %v287
  %304 = vst [vmem:[#allocation2 + $0x20] sm:$0xff] %v288
  %305 = vst [vmem:[#allocation2 + $0x28] sm:$0xff] %v289
  %306 = vst [vmem:[#allocation2 + $0x30] sm:$0xff] %v290
  %307 = vst [vmem:[#allocation2 + $0x38] sm:$0xff] %v291
  %308 = vst [vmem:[#allocation2 + $0x40] sm:$0xff] %v292
  %309 = vst [vmem:[#allocation2 + $0x48] sm:$0xff] %v293
  %310 = vst [vmem:[#allocation2 + $0x50] sm:$0xff] %v294
  %311 = vst [vmem:[#allocation2 + $0x58] sm:$0xff] %v295
  %312 = vst [vmem:[#allocation2 + $0x60] sm:$0xff] %v296
  %313 = vst [vmem:[#allocation2 + $0x68] sm:$0xff] %v297
  %314 = vst [vmem:[#allocation2 + $0x70] sm:$0xff] %v298
  %315 = vst [vmem:[#allocation2 + $0x78] sm:$0xff] %v299
  // Predicated region
  $region22: #{gcn_forward.4} parent=0 // pred_check
    %p316 = pneg %p18
  $region23: #{gcn_forward.4} parent=0 // pred_check_branch
    %318 = sbr.rel (%p316) target = $region25
  $region24: #{gcn_forward.4} parent=0 // pred_region
    %v319 = vld [vmem:[#allocation2] sm:$0xff]
    %v320 = vld [vmem:[#allocation2 + $0x8] sm:$0xff]
    %v321 = vld [vmem:[#allocation2 + $0x10] sm:$0xff]
    %v322 = vld [vmem:[#allocation2 + $0x18] sm:$0xff]
    %v323 = vld [vmem:[#allocation2 + $0x20] sm:$0xff]
    %v324 = vld [vmem:[#allocation2 + $0x28] sm:$0xff]
    %v325 = vld [vmem:[#allocation2 + $0x30] sm:$0xff]
    %v326 = vld [vmem:[#allocation2 + $0x38] sm:$0xff]
    %v327 = vld [vmem:[#allocation2 + $0x40] sm:$0xff]
    %v328 = vld [vmem:[#allocation2 + $0x48] sm:$0xff]
    %v329 = vld [vmem:[#allocation2 + $0x50] sm:$0xff]
    %v330 = vld [vmem:[#allocation2 + $0x58] sm:$0xff]
    %v331 = vld [vmem:[#allocation2 + $0x60] sm:$0xff]
    %v332 = vld [vmem:[#allocation2 + $0x68] sm:$0xff]
    %v333 = vld [vmem:[#allocation2 + $0x70] sm:$0xff]
    %v334 = vld [vmem:[#allocation2 + $0x78] sm:$0xff]
    %v335 = vld [vmem:[%s2] sm:$0x1]
    %v337 = vlaneseq
    %v338 = vshrl.u32 %v337, 7
    %v339 = vsub.s32 0, %v338
    %v340 = vrot.slane %v335, %v339
    %v342 = vadd.f32 %v319, %v340
    %v343 = vadd.f32 %v320, %v340
    %v344 = vadd.f32 %v321, %v340
    %v345 = vadd.f32 %v322, %v340
    %v346 = vadd.f32 %v323, %v340
    %v347 = vadd.f32 %v324, %v340
    %v348 = vadd.f32 %v325, %v340
    %v349 = vadd.f32 %v326, %v340
    %v350 = vadd.f32 %v327, %v340
    %v351 = vadd.f32 %v328, %v340
    %v352 = vadd.f32 %v329, %v340
    %v353 = vadd.f32 %v330, %v340
    %v354 = vadd.f32 %v331, %v340
    %v355 = vadd.f32 %v332, %v340
    %v356 = vadd.f32 %v333, %v340
    %v357 = vadd.f32 %v334, %v340
    %v358 = vmul.f32 %v342, 0.01
    %v359 = vmul.f32 %v343, 0.01
    %v360 = vmul.f32 %v344, 0.01
    %v361 = vmul.f32 %v345, 0.01
    %v362 = vmul.f32 %v346, 0.01
    %v363 = vmul.f32 %v347, 0.01
    %v364 = vmul.f32 %v348, 0.01
    %v365 = vmul.f32 %v349, 0.01
    %v366 = vmul.f32 %v350, 0.01
    %v367 = vmul.f32 %v351, 0.01
    %v368 = vmul.f32 %v352, 0.01
    %v369 = vmul.f32 %v353, 0.01
    %v370 = vmul.f32 %v354, 0.01
    %v371 = vmul.f32 %v355, 0.01
    %v372 = vmul.f32 %v356, 0.01
    %v373 = vmul.f32 %v357, 0.01
    %v374 = vmax.f32 %v342, %v358
    %v375 = vmax.f32 %v343, %v359
    %v376 = vmax.f32 %v344, %v360
    %v377 = vmax.f32 %v345, %v361
    %v378 = vmax.f32 %v346, %v362
    %v379 = vmax.f32 %v347, %v363
    %v380 = vmax.f32 %v348, %v364
    %v381 = vmax.f32 %v349, %v365
    %v382 = vmax.f32 %v350, %v366
    %v383 = vmax.f32 %v351, %v367
    %v384 = vmax.f32 %v352, %v368
    %v385 = vmax.f32 %v353, %v369
    %v386 = vmax.f32 %v354, %v370
    %v387 = vmax.f32 %v355, %v371
    %v388 = vmax.f32 %v356, %v372
    %v389 = vmax.f32 %v357, %v373
    %v390 = vpack.c.bf16 %v375, %v374
    %v391 = vpack.c.bf16 %v377, %v376
    %v392 = vpack.c.bf16 %v379, %v378
    %v393 = vpack.c.bf16 %v381, %v380
    %v394 = vpack.c.bf16 %v383, %v382
    %v395 = vpack.c.bf16 %v385, %v384
    %v396 = vpack.c.bf16 %v387, %v386
    %v397 = vpack.c.bf16 %v389, %v388
    %v398 = vld [vmem:[%s3] sm:$0xf]
    %v399 = vld [vmem:[%s3 + $0x4] sm:$0xf]
    %v400 = vld [vmem:[%s3 + $0x8] sm:$0xf]
    %v401 = vld [vmem:[%s3 + $0xc] sm:$0xf]
    %v402 = vld [vmem:[%s3 + $0x10] sm:$0xf]
    %v403 = vld [vmem:[%s3 + $0x14] sm:$0xf]
    %v404 = vld [vmem:[%s3 + $0x18] sm:$0xf]
    %v405 = vld [vmem:[%s3 + $0x1c] sm:$0xf]
    %v406 = vld [vmem:[%s3 + $0x20] sm:$0xf]
    %v407 = vld [vmem:[%s3 + $0x24] sm:$0xf]
    %v408 = vld [vmem:[%s3 + $0x28] sm:$0xf]
    %v409 = vld [vmem:[%s3 + $0x2c] sm:$0xf]
    %v410 = vld [vmem:[%s3 + $0x30] sm:$0xf]
    %v411 = vld [vmem:[%s3 + $0x34] sm:$0xf]
    %v412 = vld [vmem:[%s3 + $0x38] sm:$0xf]
    %v413 = vld [vmem:[%s3 + $0x3c] sm:$0xf]
    %v430 = vunpack.c.l.b16 %v398
    %v431 = vunpack.c.l.b16 %v399
    %v432 = vunpack.c.l.b16 %v400
    %v433 = vunpack.c.l.b16 %v401
    %v434 = vunpack.c.l.b16 %v402
    %v435 = vunpack.c.l.b16 %v403
    %v436 = vunpack.c.l.b16 %v404
    %v437 = vunpack.c.l.b16 %v405
    %v438 = vunpack.c.l.b16 %v406
    %v439 = vunpack.c.l.b16 %v407
    %v440 = vunpack.c.l.b16 %v408
    %v441 = vunpack.c.l.b16 %v409
    %v442 = vunpack.c.l.b16 %v410
    %v443 = vunpack.c.l.b16 %v411
    %v444 = vunpack.c.l.b16 %v412
    %v445 = vunpack.c.l.b16 %v413
    %v446 = vpack.c.b16 %v431, %v430
    %v447 = vpack.c.b16 %v433, %v432
    %v448 = vpack.c.b16 %v435, %v434
    %v449 = vpack.c.b16 %v437, %v436
    %v450 = vpack.c.b16 %v439, %v438
    %v451 = vpack.c.b16 %v441, %v440
    %v452 = vpack.c.b16 %v443, %v442
    %v453 = vpack.c.b16 %v445, %v444
    %462 = vmatprep.subr.bf16.mxu0 0
    %463 = vmatpush1.bf16.msra.mxu0 %v453
    %464 = vmatprep.subr.bf16.mxu0 0
    %465 = vmatpush1.bf16.msra.mxu0 %v452
    %466 = vmatprep.subr.bf16.mxu0 0
    %467 = vmatpush1.bf16.msra.mxu0 %v451
    %468 = vmatprep.subr.bf16.mxu0 0
    %469 = vmatpush1.bf16.msra.mxu0 %v450
    %470 = vmatprep.subr.bf16.mxu0 0
    %471 = vmatpush1.bf16.msra.mxu0 %v449
    %472 = vmatprep.subr.bf16.mxu0 0
    %473 = vmatpush1.bf16.msra.mxu0 %v448
    %474 = vmatprep.subr.bf16.mxu0 0
    %475 = vmatpush1.bf16.msra.mxu0 %v447
    %476 = vmatprep.subr.bf16.mxu0 0
    %477 = vmatpush1.bf16.msra.mxu0 %v446
    %478 = vmatprep.subr.bf16.mxu0 0
    %479 = vmatpush2.bf16.msra.mxu0 0
    %480 = vmatprep.subr.bf16.mxu0 0
    %481 = vmatpush2.bf16.msra.mxu0 0
    %482 = vmatprep.subr.bf16.mxu0 0
    %483 = vmatpush2.bf16.msra.mxu0 0
    %484 = vmatprep.subr.bf16.mxu0 0
    %485 = vmatpush2.bf16.msra.mxu0 0
    %486 = vmatprep.subr.bf16.mxu0 0
    %487 = vmatpush2.bf16.msra.mxu0 0
    %488 = vmatprep.subr.bf16.mxu0 0
    %489 = vmatpush2.bf16.msra.mxu0 0
    %490 = vmatprep.subr.bf16.mxu0 0
    %491 = vmatpush2.bf16.msra.mxu0 0
    %492 = vmatprep.subr.bf16.mxu0 0
    %493 = vmatpush2.bf16.msra.mxu0 0
    %494 = vmatprep.mubr.bf16.mxu0 0
    %495 = vmatmul.mubr.bf16.gmra.mxu0 %v390
    %v496 = vpop.f32.mrf.mxu0
    %v497 = vadd.f32 0.0, %v496
    %v498 = vpop.f32.mrf.mxu0
    %v499 = vpop.f32.mrf.mxu0
    %v500 = vadd.f32 0.0, %v499
    %v501 = vpop.f32.mrf.mxu0
    %502 = vmatprep.mubr.bf16.mxu0 0
    %503 = vmatmul.mubr.bf16.gmra.mxu0 %v391
    %v504 = vpop.f32.mrf.mxu0
    %v505 = vadd.f32 0.0, %v504
    %v506 = vpop.f32.mrf.mxu0
    %v507 = vpop.f32.mrf.mxu0
    %v508 = vadd.f32 0.0, %v507
    %v509 = vpop.f32.mrf.mxu0
    %510 = vmatprep.mubr.bf16.mxu0 0
    %511 = vmatmul.mubr.bf16.gmra.mxu0 %v392
    %v512 = vpop.f32.mrf.mxu0
    %v513 = vadd.f32 0.0, %v512
    %v514 = vpop.f32.mrf.mxu0
    %v515 = vpop.f32.mrf.mxu0
    %v516 = vadd.f32 0.0, %v515
    %v517 = vpop.f32.mrf.mxu0
    %518 = vmatprep.mubr.bf16.mxu0 0
    %519 = vmatmul.mubr.bf16.gmra.mxu0 %v393
    %v520 = vpop.f32.mrf.mxu0
    %v521 = vadd.f32 0.0, %v520
    %v522 = vpop.f32.mrf.mxu0
    %v523 = vpop.f32.mrf.mxu0
    %v524 = vadd.f32 0.0, %v523
    %v525 = vpop.f32.mrf.mxu0
    %526 = vmatprep.mubr.bf16.mxu0 0
    %527 = vmatmul.mubr.bf16.gmra.mxu0 %v394
    %v528 = vpop.f32.mrf.mxu0
    %v529 = vadd.f32 0.0, %v528
    %v530 = vpop.f32.mrf.mxu0
    %v531 = vpop.f32.mrf.mxu0
    %v532 = vadd.f32 0.0, %v531
    %v533 = vpop.f32.mrf.mxu0
    %534 = vmatprep.mubr.bf16.mxu0 0
    %535 = vmatmul.mubr.bf16.gmra.mxu0 %v395
    %v536 = vpop.f32.mrf.mxu0
    %v537 = vadd.f32 0.0, %v536
    %v538 = vpop.f32.mrf.mxu0
    %v539 = vpop.f32.mrf.mxu0
    %v540 = vadd.f32 0.0, %v539
    %v541 = vpop.f32.mrf.mxu0
    %542 = vmatprep.mubr.bf16.mxu0 0
    %543 = vmatmul.mubr.bf16.gmra.mxu0 %v396
    %v544 = vpop.f32.mrf.mxu0
    %v545 = vadd.f32 0.0, %v544
    %v546 = vpop.f32.mrf.mxu0
    %v547 = vpop.f32.mrf.mxu0
    %v548 = vadd.f32 0.0, %v547
    %v549 = vpop.f32.mrf.mxu0
    %550 = vmatprep.mubr.bf16.mxu0 0
    %551 = vmatmul.mubr.bf16.gmra.mxu0 %v397
    %v552 = vpop.f32.mrf.mxu0
    %v553 = vadd.f32 0.0, %v552
    %v554 = vpop.f32.mrf.mxu0
    %v555 = vpop.f32.mrf.mxu0
    %v556 = vadd.f32 0.0, %v555
    %v557 = vpop.f32.mrf.mxu0
    %558 = vdwg.mxu0
    %v559 = vpack.c.bf16 %v500, %v497
    %v560 = vpack.c.bf16 %v508, %v505
    %v561 = vpack.c.bf16 %v516, %v513
    %v562 = vpack.c.bf16 %v524, %v521
    %v563 = vpack.c.bf16 %v532, %v529
    %v564 = vpack.c.bf16 %v540, %v537
    %v565 = vpack.c.bf16 %v548, %v545
    %v566 = vpack.c.bf16 %v556, %v553
    %v575 = vunpack.c.l.b16 %v559
    %v576 = vunpack.c.h.b16 %v559
    %v577 = vunpack.c.l.b16 %v560
    %v578 = vunpack.c.h.b16 %v560
    %v579 = vunpack.c.l.b16 %v561
    %v580 = vunpack.c.h.b16 %v561
    %v581 = vunpack.c.l.b16 %v562
    %v582 = vunpack.c.h.b16 %v562
    %v583 = vunpack.c.l.b16 %v563
    %v584 = vunpack.c.h.b16 %v563
    %v585 = vunpack.c.l.b16 %v564
    %v586 = vunpack.c.h.b16 %v564
    %v587 = vunpack.c.l.b16 %v565
    %v588 = vunpack.c.h.b16 %v565
    %v589 = vunpack.c.l.b16 %v566
    %v590 = vunpack.c.h.b16 %v566
    %v591 = vpack.c.b16 %v575, %v575
    %v592 = vpack.c.b16 %v576, %v576
    %v593 = vpack.c.b16 %v577, %v577
    %v594 = vpack.c.b16 %v578, %v578
    %v595 = vpack.c.b16 %v579, %v579
    %v596 = vpack.c.b16 %v580, %v580
    %v597 = vpack.c.b16 %v581, %v581
    %v598 = vpack.c.b16 %v582, %v582
    %v599 = vpack.c.b16 %v583, %v583
    %v600 = vpack.c.b16 %v584, %v584
    %v601 = vpack.c.b16 %v585, %v585
    %v602 = vpack.c.b16 %v586, %v586
    %v603 = vpack.c.b16 %v587, %v587
    %v604 = vpack.c.b16 %v588, %v588
    %v605 = vpack.c.b16 %v589, %v589
    %v606 = vpack.c.b16 %v590, %v590
    %623 = vst [vmem:[%s4] sm:$0xf] %v591
    %624 = vst [vmem:[%s4 + $0x4] sm:$0xf] %v592
    %625 = vst [vmem:[%s4 + $0x8] sm:$0xf] %v593
    %626 = vst [vmem:[%s4 + $0xc] sm:$0xf] %v594
    %627 = vst [vmem:[%s4 + $0x10] sm:$0xf] %v595
    %628 = vst [vmem:[%s4 + $0x14] sm:$0xf] %v596
    %629 = vst [vmem:[%s4 + $0x18] sm:$0xf] %v597
    %630 = vst [vmem:[%s4 + $0x1c] sm:$0xf] %v598
    %631 = vst [vmem:[%s4 + $0x20] sm:$0xf] %v599
    %632 = vst [vmem:[%s4 + $0x24] sm:$0xf] %v600
    %633 = vst [vmem:[%s4 + $0x28] sm:$0xf] %v601
    %634 = vst [vmem:[%s4 + $0x2c] sm:$0xf] %v602
    %635 = vst [vmem:[%s4 + $0x30] sm:$0xf] %v603
    %636 = vst [vmem:[%s4 + $0x34] sm:$0xf] %v604
    %637 = vst [vmem:[%s4 + $0x38] sm:$0xf] %v605
    %638 = vst [vmem:[%s4 + $0x3c] sm:$0xf] %v606
  $region25: #{gcn_forward.4} parent=0 // pred_fallthru
    _
  // Predicated region
  $region26: #{gcn_forward.4} parent=0 // pred_check
    _
  $region27: #{gcn_forward.4} parent=0 // pred_check_branch
    %640 = sbr.rel (0) target = $region29
  $region28: #{gcn_forward.4} parent=0 // pred_region
    _
  $region29: #{gcn_forward.4} parent=0 // pred_fallthru
    _
  // Predicated region
  $region30: #{gcn_forward.4} parent=0 // pred_check
    _
  $region31: #{gcn_forward.4} parent=0 // pred_check_branch
    %642 = sbr.rel (0) target = $region33
  $region32: #{gcn_forward.4} parent=0 // pred_region
    _
  $region33: #{gcn_forward.4} parent=0 // pred_fallthru
    _

</llo_original>
